<compile_context>
chip_gen: v6e
topology: v6e:2x2x1
jax: 0.10.0
libtpu: 0.0.40
codegen_flags: <defaults>
</compile_context>

<pallas_src>
import functools

import jax
import jax.numpy as jnp
from jax.experimental import pallas as pl
from jax.experimental.pallas import tpu as pltpu


# ----------------------------------------------------------------------------
# Small helpers
# ----------------------------------------------------------------------------

def _round_up(n, m):
    return ((n + m - 1) // m) * m


def _divisors_desc(n):
    return [d for d in range(n, 0, -1) if n % d == 0]


def _compute_gamma(drop_prob, block_size, feat_size):
    # Matches the PyTorch module: gamma is derived from x.shape[2] only.
    if feat_size < block_size:
        raise ValueError("input.shape[2] can not be smaller than block_size")
    return (drop_prob / block_size ** 2) * (
        feat_size ** 2 / (feat_size - block_size + 1) ** 2
    )


# Per-grid-step VMEM budgets (bytes of blocks incl. double buffering + scratch).
_APPLY_BUDGET = 24 << 20
_POOL_BUDGET = 28 << 20


def _vmem_limit(footprint_bytes):
    """Explicit scoped-VMEM limit: footprint * 1.5 + 4 MiB headroom, clamped
    to a range that is safe on every generation (v7x has 64 MiB physical)."""
    return int(min(48 << 20, max(24 << 20, footprint_bytes * 3 // 2 + (4 << 20))))


def _choose_pool_bct(bc_pad, h, w, mask_h, mask_w, hp, wp):
    """VMEM-byte-aware B*C tile for the pooling pass (full H per tile)."""
    per_chan = (2 * mask_h * mask_w        # int8 mask in (double buffered)
                + 2 * h * w                # int8 keep out (double buffered)
                + 4 * hp * wp              # f32 pad scratch
                + 4 * hp * w)              # colmax intermediate (spill headroom)
    cands = [d for d in _divisors_desc(bc_pad) if d % 128 == 0] or [bc_pad]
    for bct in cands:
        if per_chan * bct <= _POOL_BUDGET:
            return bct, per_chan * bct
    # TODO(synk): H-tile pass 1 (with block_size-1 halos) for huge spatial maps.
    bct = cands[-1]
    return bct, per_chan * bct


def _choose_apply_tiles(bc_pad, h, w, x_itemsize):
    """VMEM-byte-aware (H, B*C) tiles for the elementwise apply pass."""
    per_elem = 2 * (2 * x_itemsize + 1)    # x in + out (x dtype) + int8 keep, x2 buffers
    cands = [d for d in _divisors_desc(bc_pad) if d % 128 == 0] or [bc_pad]
    h_divs = _divisors_desc(h)
    for bct in cands:
        for th in h_divs:
            if per_elem * th * w * bct <= _APPLY_BUDGET:
                # Prefer >= 2 total grid steps (pipelining + v7x megacore) as
                # long as the H tile stays >= 8 rows.
                if (bc_pad // bct) * (h // th) < 2:
                    for th2 in h_divs:
                        if (th2 < th and th2 >= 8
                                and per_elem * th2 * w * bct <= _APPLY_BUDGET):
                            th = th2
                            break
                return th, bct, per_elem * th * w * bct
    th, bct = h_divs[-1], cands[-1]
    return th, bct, per_elem * th * w * bct


# ----------------------------------------------------------------------------
# Pass 1: pooled keep-mask (block_mask) from the Bernoulli mask
# ----------------------------------------------------------------------------

def _pool_kernel(m_ref, keep_ref, pad_ref, *, bs, a_w):
    """keep = 1 - max_pool2d(zero-padded mask) for the current B*C tile.

    m_ref    : (mask_h, mask_w, bct) int8   un-padded Bernoulli sample
    keep_ref : (H, W, bct)          int8    pooled keep mask ({0, 1})
    pad_ref  : (hp, wp, bct)        f32     VMEM zero-padded frame
    """
    hp, wp, bct = pad_ref.shape
    mask_h, mask_w, _ = m_ref.shape
    h, w, _ = keep_ref.shape
    off_h = bs - 1                      # row offset of the mask in the frame

    if off_h > 0:
        # Zero only the border strips, and only once: the grid axis is
        # "arbitrary" (single core, sequential), the scratch persists across
        # grid steps and the interior is fully overwritten below every step.
        @pl.when(pl.program_id(0) == 0)
        def _():
            def zero(r, c):
                return jnp.zeros((r, c, bct), jnp.float32)
            pad_ref[0:off_h, :, :] = zero(off_h, wp)                 # top rows
            pad_ref[h:hp, :, :] = zero(hp - h, wp)                   # bottom rows
            pad_ref[off_h:h, 0:a_w, :] = zero(mask_h, a_w)           # left (aligned)
            pad_ref[off_h:h, a_w + mask_w:wp, :] = zero(mask_h, wp - a_w - mask_w)

    # Interior fill: column offset a_w is rounded up to a multiple of 8
    # sublanes so the store starts on a tile boundary (dense vst).
    pad_ref[off_h:off_h + mask_h, a_w:a_w + mask_w, :] = m_ref[...].astype(jnp.float32)

    # Separable stride-1 max pool (zero padding == -inf padding for a {0,1}
    # mask).  W direction first, as shifted-window *loads* from the VMEM
    # scratch (ref-side sublane offsets, no value relayout); then the H
    # direction as leading-axis maxima (third-minor addressing only).
    base = a_w - (bs - 1)
    colmax = pad_ref[:, base:base + w, :]
    for b in range(1, bs):
        colmax = jnp.maximum(colmax, pad_ref[:, base + b:base + b + w, :])
    pooled = colmax[0:h]
    for a in range(1, bs):
        pooled = jnp.maximum(pooled, colmax[a:a + h])

    keep_ref[...] = (1.0 - pooled).astype(jnp.int8)


# ----------------------------------------------------------------------------
# Pass 2: out = x * keep * (numel / sum(keep))   (purely elementwise)
# ----------------------------------------------------------------------------

def _apply_kernel(scale_ref, x_ref, keep_ref, o_ref):
    # TODO(synk): keep the multiply chain in bf16 for bf16 inputs on v6e/v7x.
    scale = scale_ref[0, 0]
    o_ref[...] = (x_ref[...].astype(jnp.float32)
                  * keep_ref[...].astype(jnp.float32)
                  * scale).astype(o_ref.dtype)


# ----------------------------------------------------------------------------
# Wrapper
# ----------------------------------------------------------------------------

def dropblock_apply(x, mask, block_size):
    """Apply DropBlock given a pre-sampled Bernoulli mask.

    x    : (B, C, H, W)
    mask : (B, C, H - block_size + 1, W - block_size + 1), bool / {0, 1}
    """
    B, C, H, W = x.shape
    bs = int(block_size)
    if bs % 2 != 1:
        # The reference PyTorch module produces inconsistent shapes for even
        # block_size; only the (default) odd case is supported.
        raise ValueError("block_size must be odd")
    if H < bs or W < bs:
        raise ValueError("spatial dims can not be smaller than block_size")

    mask_h = H - (bs - 1)
    mask_w = W - (bs - 1)
    bc = B * C
    numel = float(bc * H * W)

    # Lane-dense layout: (H, W, B*C) with B*C padded up to a multiple of 128
    # so stores are full-width.  Padded channels get an all-ones mask, hence a
    # zero keep mask, hence zero contribution to the global sum.
    bc_pad = max(128, _round_up(bc, 128))
    x_t = jnp.transpose(x.reshape(bc, H, W), (1, 2, 0))
    m_t = jnp.transpose(mask.reshape(bc, mask_h, mask_w).astype(jnp.int8), (1, 2, 0))
    if bc_pad != bc:
        x_t = jnp.pad(x_t, ((0, 0), (0, 0), (0, bc_pad - bc)))
        m_t = jnp.pad(m_t, ((0, 0), (0, 0), (0, bc_pad - bc)), constant_values=1)

    a_w = _round_up(bs - 1, 8)          # sublane-aligned interior column offset
    hp = H + bs - 1                     # padded-frame rows
    wp = a_w + W                        # padded-frame cols actually read

    # ---- Pass 1: pooled keep mask (int8), tiled over B*C only.
    bct1, foot1 = _choose_pool_bct(bc_pad, H, W, mask_h, mask_w, hp, wp)
    keep = pl.pallas_call(
        functools.partial(_pool_kernel, bs=bs, a_w=a_w),
        out_shape=jax.ShapeDtypeStruct((H, W, bc_pad), jnp.int8),
        grid=(bc_pad // bct1,),
        in_specs=[pl.BlockSpec((mask_h, mask_w, bct1), lambda i: (0, 0, i))],
        out_specs=pl.BlockSpec((H, W, bct1), lambda i: (0, 0, i)),
        scratch_shapes=[pltpu.VMEM((hp, wp, bct1), jnp.float32)],
        compiler_params=pltpu.CompilerParams(
            dimension_semantics=("arbitrary",),   # border zeroing done once at step 0
            vmem_limit_bytes=_vmem_limit(foot1)),
    )(m_t)

    # Exact rescale factor, computed once in XLA (matches the reference's
    # exact division; padded channels have keep == 0 so the sum is exact).
    # NOTE: total == 0 (every block dropped) yields inf/nan exactly like the
    # PyTorch reference's division by block_mask.sum() == 0.
    total = jnp.sum(keep.astype(jnp.float32))
    scale = (jnp.float32(numel) / total).reshape(1, 1)

    # ---- Pass 2: elementwise apply, tiled over H and B*C (both "parallel").
    th, bct2, foot2 = _choose_apply_tiles(bc_pad, H, W, x.dtype.itemsize)
    out_t = pl.pallas_call(
        _apply_kernel,
        out_shape=jax.ShapeDtypeStruct((H, W, bc_pad), x.dtype),
        grid=(H // th, bc_pad // bct2),
        in_specs=[
            pl.BlockSpec(memory_space=pltpu.MemorySpace.SMEM),       # scale (1,1)
            pl.BlockSpec((th, W, bct2), lambda h, c: (h, 0, c)),     # x
            pl.BlockSpec((th, W, bct2), lambda h, c: (h, 0, c)),     # keep (int8)
        ],
        out_specs=pl.BlockSpec((th, W, bct2), lambda h, c: (h, 0, c)),
        compiler_params=pltpu.CompilerParams(
            dimension_semantics=("parallel", "parallel"),
            vmem_limit_bytes=_vmem_limit(foot2)),
    )(scale, x_t, keep)

    out_t = out_t[:, :, :bc]
    return jnp.transpose(out_t, (2, 0, 1)).reshape(B, C, H, W)


def dropblock3d_forward(x, key, drop_prob=0.1, block_size=7, training=True):
    """DropBlock forward pass; x has PyTorch NCHW layout (B, C, H, W).

    The Bernoulli sampling (torch.distributions.Bernoulli in the spec) stays
    in plain JAX; the pooling / rescale / apply hot path runs in Pallas.
    """
    if (not training) or drop_prob == 0.0:
        return x
    B, C, H, W = x.shape
    gamma = _compute_gamma(drop_prob, block_size, H)
    mask_h = H - (block_size - 1)
    mask_w = W - (block_size - 1)
    mask = jax.random.bernoulli(key, gamma, (B, C, mask_h, mask_w))
    return dropblock_apply(x, mask, block_size)


# ----------------------------------------------------------------------------
# Pure-JAX reference (replicates the PyTorch forward, consuming the same mask)
# ----------------------------------------------------------------------------

def _dropblock_reference(x, mask, block_size):
    p = block_size // 2
    m = jnp.pad(mask.astype(jnp.float32), ((0, 0), (0, 0), (p, p), (p, p)))
    pooled = jax.lax.reduce_window(
        m, -jnp.inf, jax.lax.max,
        window_dimensions=(1, 1, block_size, block_size),
        window_strides=(1, 1, 1, 1),
        padding=((0, 0), (0, 0), (p, p), (p, p)))
    block_mask = 1.0 - pooled
    out = x * block_mask.astype(x.dtype)
    out = out * block_mask.size / jnp.sum(block_mask)
    return out


if __name__ == "__main__":
    key = jax.random.PRNGKey(0)
    k_x, k_mask = jax.random.split(key)

    B, C, H, W = 2, 4, 16, 16
    drop_prob, block_size = 0.1, 7
    x = jax.random.normal(k_x, (B, C, H, W), dtype=jnp.float32)

    # Full forward (samples its own mask from k_mask).
    out = dropblock3d_forward(x, k_mask, drop_prob=drop_prob,
                              block_size=block_size, training=True)
    out = jax.block_until_ready(out)
    assert out.shape == x.shape and out.dtype == x.dtype

    # Exact-mask comparison: same pre-sampled mask through kernel + reference.
    gamma = _compute_gamma(drop_prob, block_size, H)
    mask = jax.random.bernoulli(
        k_mask, gamma, (B, C, H - block_size + 1, W - block_size + 1))
    out_k = jax.block_until_ready(dropblock_apply(x, mask, block_size))
    ref = _dropblock_reference(x, mask, block_size)

    # Drop pattern must match exactly; values to float rounding (the rescale
    # division is now exact, computed in XLA between the two passes).
    assert bool(jnp.array_equal(out_k == 0, ref == 0))
    assert jnp.allclose(out_k, ref, rtol=1e-5, atol=1e-6)

    # Eval-mode / p=0 paths return x unchanged.
    assert jnp.array_equal(dropblock3d_forward(x, k_mask, drop_prob=0.0), x)
    assert jnp.array_equal(
        dropblock3d_forward(x, k_mask, drop_prob=drop_prob,
                            block_size=block_size, training=False), x)

    print("KERNEL_OK")
</pallas_src>

<mosaic_0001>
module attributes {stable_mosaic.version = 11 : i64} {
  func.func @_pool_kernel(%arg0: i32, %arg1: memref<10x10x128xi8, #tpu.memory_space<vmem>>, %arg2: memref<16x16x128xi8, #tpu.memory_space<vmem>>, %arg3: memref<22x24x128xf32, #tpu.memory_space<vmem>>) attributes {dimension_semantics = [#tpu.dimension_semantics<arbitrary>], iteration_bounds = array<i64: 1>, scalar_prefetch = 0 : i64, scratch_operands = 1 : i64, tpu.core_type = #tpu.core_type<tc>, window_params = [{transform_indices = @transform_0, window_bounds = array<i64: 10, 10, 128>}, {transform_indices = @transform_1, window_bounds = array<i64: 16, 16, 128>}]} {
    %c0_i32 = arith.constant 0 : i32
    %0 = arith.cmpi eq, %arg0, %c0_i32 : i32
    %1 = arith.extui %0 : i1 to i32
    %c0_i32_0 = arith.constant 0 : i32
    %2 = arith.cmpi ne, %1, %c0_i32_0 : i32
    scf.if %2 {
      %cst_23 = arith.constant 0.000000e+00 : f32
      %36 = vector.broadcast %cst_23 : f32 to vector<6x24x128xf32>
      %c0_24 = arith.constant 0 : index
      %c0_25 = arith.constant 0 : index
      %c0_26 = arith.constant 0 : index
      %37 = vector.load %arg3[%c0_24, %c0_25, %c0_26] : memref<22x24x128xf32, #tpu.memory_space<vmem>>, vector<6x24x128xf32>
      tpu.vector_store %arg3[%c0_24, %c0_25, %c0_26], %36 {strides = array<i32>} : memref<22x24x128xf32, #tpu.memory_space<vmem>>, vector<6x24x128xf32>,
      %cst_27 = arith.constant 0.000000e+00 : f32
      %38 = vector.broadcast %cst_27 : f32 to vector<6x24x128xf32>
      %c16 = arith.constant 16 : index
      %c0_28 = arith.constant 0 : index
      %c0_29 = arith.constant 0 : index
      %39 = vector.load %arg3[%c16, %c0_28, %c0_29] : memref<22x24x128xf32, #tpu.memory_space<vmem>>, vector<6x24x128xf32>
      tpu.vector_store %arg3[%c16, %c0_28, %c0_29], %38 {strides = array<i32>} : memref<22x24x128xf32, #tpu.memory_space<vmem>>, vector<6x24x128xf32>,
      %cst_30 = arith.constant 0.000000e+00 : f32
      %40 = vector.broadcast %cst_30 : f32 to vector<10x8x128xf32>
      %c6_31 = arith.constant 6 : index
      %c0_32 = arith.constant 0 : index
      %c0_33 = arith.constant 0 : index
      %41 = vector.load %arg3[%c6_31, %c0_32, %c0_33] : memref<22x24x128xf32, #tpu.memory_space<vmem>>, vector<10x8x128xf32>
      tpu.vector_store %arg3[%c6_31, %c0_32, %c0_33], %40 {strides = array<i32>} : memref<22x24x128xf32, #tpu.memory_space<vmem>>, vector<10x8x128xf32>,
      %cst_34 = arith.constant 0.000000e+00 : f32
      %42 = vector.broadcast %cst_34 : f32 to vector<10x6x128xf32>
      %c6_35 = arith.constant 6 : index
      %c18 = arith.constant 18 : index
      %c0_36 = arith.constant 0 : index
      %43 = vector.load %arg3[%c6_35, %c18, %c0_36] : memref<22x24x128xf32, #tpu.memory_space<vmem>>, vector<10x6x128xf32>
      tpu.vector_store %arg3[%c6_35, %c18, %c0_36], %42 {strides = array<i32>} : memref<22x24x128xf32, #tpu.memory_space<vmem>>, vector<10x6x128xf32>,
    } else {
    }
    %c0 = arith.constant 0 : index
    %c0_1 = arith.constant 0 : index
    %c0_2 = arith.constant 0 : index
    %3 = vector.load %arg1[%c0, %c0_1, %c0_2] : memref<10x10x128xi8, #tpu.memory_space<vmem>>, vector<10x10x128xi8>
    %4 = arith.sitofp %3 : vector<10x10x128xi8> to vector<10x10x128xf32>
    %c6 = arith.constant 6 : index
    %c8 = arith.constant 8 : index
    %c0_3 = arith.constant 0 : index
    %5 = vector.load %arg3[%c6, %c8, %c0_3] : memref<22x24x128xf32, #tpu.memory_space<vmem>>, vector<10x10x128xf32>
    tpu.vector_store %arg3[%c6, %c8, %c0_3], %4 {strides = array<i32>} : memref<22x24x128xf32, #tpu.memory_space<vmem>>, vector<10x10x128xf32>,
    %c0_4 = arith.constant 0 : index
    %c2 = arith.constant 2 : index
    %c0_5 = arith.constant 0 : index
    %6 = vector.load %arg3[%c0_4, %c2, %c0_5] : memref<22x24x128xf32, #tpu.memory_space<vmem>>, vector<22x16x128xf32>
    %c0_6 = arith.constant 0 : index
    %c3 = arith.constant 3 : index
    %c0_7 = arith.constant 0 : index
    %7 = vector.load %arg3[%c0_6, %c3, %c0_7] : memref<22x24x128xf32, #tpu.memory_space<vmem>>, vector<22x16x128xf32>
    %8 = arith.maximumf %6, %7 : vector<22x16x128xf32>
    %c0_8 = arith.constant 0 : index
    %c4 = arith.constant 4 : index
    %c0_9 = arith.constant 0 : index
    %9 = vector.load %arg3[%c0_8, %c4, %c0_9] : memref<22x24x128xf32, #tpu.memory_space<vmem>>, vector<22x16x128xf32>
    %10 = arith.maximumf %8, %9 : vector<22x16x128xf32>
    %c0_10 = arith.constant 0 : index
    %c5 = arith.constant 5 : index
    %c0_11 = arith.constant 0 : index
    %11 = vector.load %arg3[%c0_10, %c5, %c0_11] : memref<22x24x128xf32, #tpu.memory_space<vmem>>, vector<22x16x128xf32>
    %12 = arith.maximumf %10, %11 : vector<22x16x128xf32>
    %c0_12 = arith.constant 0 : index
    %c6_13 = arith.constant 6 : index
    %c0_14 = arith.constant 0 : index
    %13 = vector.load %arg3[%c0_12, %c6_13, %c0_14] : memref<22x24x128xf32, #tpu.memory_space<vmem>>, vector<22x16x128xf32>
    %14 = arith.maximumf %12, %13 : vector<22x16x128xf32>
    %c0_15 = arith.constant 0 : index
    %c7 = arith.constant 7 : index
    %c0_16 = arith.constant 0 : index
    %15 = vector.load %arg3[%c0_15, %c7, %c0_16] : memref<22x24x128xf32, #tpu.memory_space<vmem>>, vector<22x16x128xf32>
    %16 = arith.maximumf %14, %15 : vector<22x16x128xf32>
    %c0_17 = arith.constant 0 : index
    %c8_18 = arith.constant 8 : index
    %c0_19 = arith.constant 0 : index
    %17 = vector.load %arg3[%c0_17, %c8_18, %c0_19] : memref<22x24x128xf32, #tpu.memory_space<vmem>>, vector<22x16x128xf32>
    %18 = arith.maximumf %16, %17 : vector<22x16x128xf32>
    %19 = vector.extract_strided_slice %18 {offsets = [0, 0, 0], sizes = [16, 16, 128], strides = [1, 1, 1]} : vector<22x16x128xf32> to vector<16x16x128xf32>
    %20 = vector.extract_strided_slice %18 {offsets = [1, 0, 0], sizes = [16, 16, 128], strides = [1, 1, 1]} : vector<22x16x128xf32> to vector<16x16x128xf32>
    %21 = arith.maximumf %19, %20 : vector<16x16x128xf32>
    %22 = vector.extract_strided_slice %18 {offsets = [2, 0, 0], sizes = [16, 16, 128], strides = [1, 1, 1]} : vector<22x16x128xf32> to vector<16x16x128xf32>
    %23 = arith.maximumf %21, %22 : vector<16x16x128xf32>
    %24 = vector.extract_strided_slice %18 {offsets = [3, 0, 0], sizes = [16, 16, 128], strides = [1, 1, 1]} : vector<22x16x128xf32> to vector<16x16x128xf32>
    %25 = arith.maximumf %23, %24 : vector<16x16x128xf32>
    %26 = vector.extract_strided_slice %18 {offsets = [4, 0, 0], sizes = [16, 16, 128], strides = [1, 1, 1]} : vector<22x16x128xf32> to vector<16x16x128xf32>
    %27 = arith.maximumf %25, %26 : vector<16x16x128xf32>
    %28 = vector.extract_strided_slice %18 {offsets = [5, 0, 0], sizes = [16, 16, 128], strides = [1, 1, 1]} : vector<22x16x128xf32> to vector<16x16x128xf32>
    %29 = arith.maximumf %27, %28 : vector<16x16x128xf32>
    %30 = vector.extract_strided_slice %18 {offsets = [6, 0, 0], sizes = [16, 16, 128], strides = [1, 1, 1]} : vector<22x16x128xf32> to vector<16x16x128xf32>
    %31 = arith.maximumf %29, %30 : vector<16x16x128xf32>
    %cst = arith.constant 1.000000e+00 : f32
    %32 = vector.broadcast %cst : f32 to vector<16x16x128xf32>
    %33 = arith.subf %32, %31 : vector<16x16x128xf32>
    %34 = arith.fptosi %33 : vector<16x16x128xf32> to vector<16x16x128xi8>
    %c0_20 = arith.constant 0 : index
    %c0_21 = arith.constant 0 : index
    %c0_22 = arith.constant 0 : index
    %35 = vector.load %arg2[%c0_20, %c0_21, %c0_22] : memref<16x16x128xi8, #tpu.memory_space<vmem>>, vector<16x16x128xi8>
    tpu.vector_store %arg2[%c0_20, %c0_21, %c0_22], %34 {strides = array<i32>} : memref<16x16x128xi8, #tpu.memory_space<vmem>>, vector<16x16x128xi8>,
    return
  }
  func.func @transform_0(%arg0: i32) -> (i32, i32, i32) {
    %c0_i32 = arith.constant 0 : i32
    %c0_i32_0 = arith.constant 0 : i32
    %c0_i32_1 = arith.constant 0 : i32
    return %c0_i32, %c0_i32_0, %arg0 : i32, i32, i32
  }
  func.func @transform_1(%arg0: i32) -> (i32, i32, i32) {
    %c0_i32 = arith.constant 0 : i32
    %c0_i32_0 = arith.constant 0 : i32
    %c0_i32_1 = arith.constant 0 : i32
    return %c0_i32, %c0_i32_0, %arg0 : i32, i32, i32
  }
}

</mosaic_0001>

<llo_original>
// kernel: tpu_custom_call.1
$region0: #{tpu_custom_call.1}
  #allocation0 [shape = 'u32[]', space=smem, size = 0x4, offset = 0x4, fixed_abs, tag = 'smem constant byte address 0x4 - core index']
  #allocation1 [shape = 'u32[144,128]{1,0:T(1,128)}', space=vmem, size = 0x12000, scoped, tag = 'internal scratch']
  #allocation2 [shape = 'f32[22,24,128]{2,1,0:T(8,128)}', space=vmem, size = 0x42000, scoped, tag = 'scratch operand']
  %s0 = inlined_call_operand.hbm [shape: s8[10,10,128], index: 0, kind: input, shape index: {}]
  %s1 = inlined_call_operand.hbm [shape: s8[16,16,128], index: 1, kind: output, shape index: {}]
  %s2 = sld [smem:[#allocation0]]
  $region22: #{tpu_custom_call.1} parent=0
    _
  %s4 = ssub.s32 1, %s2
  %s5 = scalar_select 0, %s4, %s2
  $region1: #{tpu_custom_call.1} parent=0
    #allocation3 [shape = 'u8[20480]{0}', space=vmem, size = 0x5000, scoped, tag = 'input window, operand 0, single buffered']
    #allocation4 [shape = 's32[1]{0}', space=sflag, size = 0x4, scoped, tag = 'scoped memory for tpu_custom_call.1']
    #allocation5 [shape = 's32[1]{0}', space=sflag, size = 0x4, scoped, tag = 'scoped memory for tpu_custom_call.1']
    #allocation6 [shape = 'u8[32768]{0}', space=vmem, size = 0x8000, scoped, tag = 'output window, operand 0, single buffered']
    %6 = vsyncpa [#allocation4], 0
    %7 = vsyncpa [#allocation5], 0
    // Predicated region
    $region2: #{tpu_custom_call.1} parent=1 // pred_check
      _
    $region3: #{tpu_custom_call.1} parent=1 // pred_check_branch
      %9 = sbr.rel (0) target = $region5
    $region4: #{tpu_custom_call.1} parent=1 // pred_region
      %s11 = ssub.s32 640, 640
      %12 = vsyncadd [#allocation4], %s11
      %s13 = sshll.u32 [#allocation3], 4
      %s14 = int_to_ptr.vmem [resolvable:$true] %s13
      %19 = dma.hbm_to_vmem [thread:$0]  %s0, 640, %s14, [#allocation4], 32, 32, 2
    $region5: #{tpu_custom_call.1} parent=1 // pred_fallthru
      _
    // Predicated region
    $region6: #{tpu_custom_call.1} parent=1 // pred_check
      _
    $region7: #{tpu_custom_call.1} parent=1 // pred_check_branch
      %21 = sbr.rel (0) target = $region9
    $region8: #{tpu_custom_call.1} parent=1 // pred_region
      %22 = dma.done [#allocation4], 640
    $region9: #{tpu_custom_call.1} parent=1 // pred_fallthru
      _
    %p23 = scmp.eq.s32.totalorder 0, 0
    // Predicated region
    $region10: #{tpu_custom_call.1} parent=1 // pred_check
      %p24 = pneg %p23
    $region11: #{tpu_custom_call.1} parent=1 // pred_check_branch
      %26 = sbr.rel (%p24) target = $region13
    $region12: #{tpu_custom_call.1} parent=1 // pred_region
      %27 = vst [vmem:[#allocation2] sm:$0xff] 0.0
      %28 = vst [vmem:[#allocation2 + $0x8] sm:$0xff] 0.0
      %29 = vst [vmem:[#allocation2 + $0x10] sm:$0xff] 0.0
      %30 = vst [vmem:[#allocation2 + $0x18] sm:$0xff] 0.0
      %31 = vst [vmem:[#allocation2 + $0x20] sm:$0xff] 0.0
      %32 = vst [vmem:[#allocation2 + $0x28] sm:$0xff] 0.0
      %33 = vst [vmem:[#allocation2 + $0x30] sm:$0xff] 0.0
      %34 = vst [vmem:[#allocation2 + $0x38] sm:$0xff] 0.0
      %35 = vst [vmem:[#allocation2 + $0x40] sm:$0xff] 0.0
      %36 = vst [vmem:[#allocation2 + $0x48] sm:$0xff] 0.0
      %37 = vst [vmem:[#allocation2 + $0x50] sm:$0xff] 0.0
      %38 = vst [vmem:[#allocation2 + $0x58] sm:$0xff] 0.0
      %39 = vst [vmem:[#allocation2 + $0x60] sm:$0xff] 0.0
      %40 = vst [vmem:[#allocation2 + $0x68] sm:$0xff] 0.0
      %41 = vst [vmem:[#allocation2 + $0x70] sm:$0xff] 0.0
      %42 = vst [vmem:[#allocation2 + $0x78] sm:$0xff] 0.0
      %43 = vst [vmem:[#allocation2 + $0x80] sm:$0xff] 0.0
      %44 = vst [vmem:[#allocation2 + $0x88] sm:$0xff] 0.0
      %s45 = scalar_lea.vmem [#allocation2], 384
      %46 = vst [vmem:[%s45] sm:$0xff] 0.0
      %47 = vst [vmem:[%s45 + $0x8] sm:$0xff] 0.0
      %48 = vst [vmem:[%s45 + $0x10] sm:$0xff] 0.0
      %49 = vst [vmem:[%s45 + $0x18] sm:$0xff] 0.0
      %50 = vst [vmem:[%s45 + $0x20] sm:$0xff] 0.0
      %51 = vst [vmem:[%s45 + $0x28] sm:$0xff] 0.0
      %52 = vst [vmem:[%s45 + $0x30] sm:$0xff] 0.0
      %53 = vst [vmem:[%s45 + $0x38] sm:$0xff] 0.0
      %54 = vst [vmem:[%s45 + $0x40] sm:$0xff] 0.0
      %55 = vst [vmem:[%s45 + $0x48] sm:$0xff] 0.0
      %56 = vst [vmem:[%s45 + $0x50] sm:$0xff] 0.0
      %57 = vst [vmem:[%s45 + $0x58] sm:$0xff] 0.0
      %58 = vst [vmem:[%s45 + $0x60] sm:$0xff] 0.0
      %59 = vst [vmem:[%s45 + $0x68] sm:$0xff] 0.0
      %60 = vst [vmem:[%s45 + $0x70] sm:$0xff] 0.0
      %61 = vst [vmem:[%s45 + $0x78] sm:$0xff] 0.0
      %62 = vst [vmem:[%s45 + $0x80] sm:$0xff] 0.0
      %63 = vst [vmem:[%s45 + $0x88] sm:$0xff] 0.0
      %s64 = scalar_lea.vmem [#allocation2], 144
      %65 = vst [vmem:[%s64] sm:$0xff] 0.0
      %66 = vst [vmem:[%s64 + $0x18] sm:$0xff] 0.0
      %67 = vst [vmem:[%s64 + $0x30] sm:$0xff] 0.0
      %68 = vst [vmem:[%s64 + $0x48] sm:$0xff] 0.0
      %69 = vst [vmem:[%s64 + $0x60] sm:$0xff] 0.0
      %70 = vst [vmem:[%s64 + $0x78] sm:$0xff] 0.0
      %71 = vst [vmem:[%s64 + $0x90] sm:$0xff] 0.0
      %72 = vst [vmem:[%s64 + $0xa8] sm:$0xff] 0.0
      %73 = vst [vmem:[%s64 + $0xc0] sm:$0xff] 0.0
      %74 = vst [vmem:[%s64 + $0xd8] sm:$0xff] 0.0
      %75 = vst [vmem:[%s64 + $0x12] sm:$0x3f] 0.0
      %76 = vst [vmem:[%s64 + $0x2a] sm:$0x3f] 0.0
      %77 = vst [vmem:[%s64 + $0x42] sm:$0x3f] 0.0
      %78 = vst [vmem:[%s64 + $0x5a] sm:$0x3f] 0.0
      %79 = vst [vmem:[%s64 + $0x72] sm:$0x3f] 0.0
      %80 = vst [vmem:[%s64 + $0x8a] sm:$0x3f] 0.0
      %81 = vst [vmem:[%s64 + $0xa2] sm:$0x3f] 0.0
      %82 = vst [vmem:[%s64 + $0xba] sm:$0x3f] 0.0
      %83 = vst [vmem:[%s64 + $0xd2] sm:$0x3f] 0.0
      %84 = vst [vmem:[%s64 + $0xea] sm:$0x3f] 0.0
    $region13: #{tpu_custom_call.1} parent=1 // pred_fallthru
      _
    %v85 = vld [vmem:[#allocation3] sm:$0x3]
    %v86 = vld [vmem:[#allocation3 + $0x2] sm:$0x1]
    %v87 = vld [vmem:[#allocation3 + $0x4] sm:$0x3]
    %v88 = vld [vmem:[#allocation3 + $0x6] sm:$0x1]
    %v89 = vld [vmem:[#allocation3 + $0x8] sm:$0x3]
    %v90 = vld [vmem:[#allocation3 + $0xa] sm:$0x1]
    %v91 = vld [vmem:[#allocation3 + $0xc] sm:$0x3]
    %v92 = vld [vmem:[#allocation3 + $0xe] sm:$0x1]
    %v93 = vld [vmem:[#allocation3 + $0x10] sm:$0x3]
    %v94 = vld [vmem:[#allocation3 + $0x12] sm:$0x1]
    %v95 = vld [vmem:[#allocation3 + $0x14] sm:$0x3]
    %v96 = vld [vmem:[#allocation3 + $0x16] sm:$0x1]
    %v97 = vld [vmem:[#allocation3 + $0x18] sm:$0x3]
    %v98 = vld [vmem:[#allocation3 + $0x1a] sm:$0x1]
    %v99 = vld [vmem:[#allocation3 + $0x1c] sm:$0x3]
    %v100 = vld [vmem:[#allocation3 + $0x1e] sm:$0x1]
    %v101 = vld [vmem:[#allocation3 + $0x20] sm:$0x3]
    %v102 = vld [vmem:[#allocation3 + $0x22] sm:$0x1]
    %v103 = vld [vmem:[#allocation3 + $0x24] sm:$0x3]
    %v104 = vld [vmem:[#allocation3 + $0x26] sm:$0x1]
    %v105 = vunpack.c.0.s8 %v85
    %v106 = vunpack.c.0.s8 %v86
    %v107 = vunpack.c.0.s8 %v87
    %v108 = vunpack.c.0.s8 %v88
    %v109 = vunpack.c.0.s8 %v89
    %v110 = vunpack.c.0.s8 %v90
    %v111 = vunpack.c.0.s8 %v91
    %v112 = vunpack.c.0.s8 %v92
    %v113 = vunpack.c.0.s8 %v93
    %v114 = vunpack.c.0.s8 %v94
    %v115 = vunpack.c.0.s8 %v95
    %v116 = vunpack.c.0.s8 %v96
    %v117 = vunpack.c.0.s8 %v97
    %v118 = vunpack.c.0.s8 %v98
    %v119 = vunpack.c.0.s8 %v99
    %v120 = vunpack.c.0.s8 %v100
    %v121 = vunpack.c.0.s8 %v101
    %v122 = vunpack.c.0.s8 %v102
    %v123 = vunpack.c.0.s8 %v103
    %v124 = vunpack.c.0.s8 %v104
    %v125 = vcvt.s32.f32 %v105
    %v126 = vcvt.s32.f32 %v106
    %v127 = vcvt.s32.f32 %v107
    %v128 = vcvt.s32.f32 %v108
    %v129 = vcvt.s32.f32 %v109
    %v130 = vcvt.s32.f32 %v110
    %v131 = vcvt.s32.f32 %v111
    %v132 = vcvt.s32.f32 %v112
    %v133 = vcvt.s32.f32 %v113
    %v134 = vcvt.s32.f32 %v114
    %v135 = vcvt.s32.f32 %v115
    %v136 = vcvt.s32.f32 %v116
    %v137 = vcvt.s32.f32 %v117
    %v138 = vcvt.s32.f32 %v118
    %v139 = vcvt.s32.f32 %v119
    %v140 = vcvt.s32.f32 %v120
    %v141 = vcvt.s32.f32 %v121
    %v142 = vcvt.s32.f32 %v122
    %v143 = vcvt.s32.f32 %v123
    %v144 = vcvt.s32.f32 %v124
    %s145 = scalar_lea.vmem [#allocation2], 144
    %146 = vst [vmem:[%s145 + $0x8] sm:$0xff] %v125
    %147 = vst [vmem:[%s145 + $0x10] sm:$0x3] %v126
    %148 = vst [vmem:[%s145 + $0x20] sm:$0xff] %v127
    %149 = vst [vmem:[%s145 + $0x28] sm:$0x3] %v128
    %150 = vst [vmem:[%s145 + $0x38] sm:$0xff] %v129
    %151 = vst [vmem:[%s145 + $0x40] sm:$0x3] %v130
    %152 = vst [vmem:[%s145 + $0x50] sm:$0xff] %v131
    %153 = vst [vmem:[%s145 + $0x58] sm:$0x3] %v132
    %154 = vst [vmem:[%s145 + $0x68] sm:$0xff] %v133
    %155 = vst [vmem:[%s145 + $0x70] sm:$0x3] %v134
    %156 = vst [vmem:[%s145 + $0x80] sm:$0xff] %v135
    %157 = vst [vmem:[%s145 + $0x88] sm:$0x3] %v136
    %158 = vst [vmem:[%s145 + $0x98] sm:$0xff] %v137
    %159 = vst [vmem:[%s145 + $0xa0] sm:$0x3] %v138
    %160 = vst [vmem:[%s145 + $0xb0] sm:$0xff] %v139
    %161 = vst [vmem:[%s145 + $0xb8] sm:$0x3] %v140
    %162 = vst [vmem:[%s145 + $0xc8] sm:$0xff] %v141
    %163 = vst [vmem:[%s145 + $0xd0] sm:$0x3] %v142
    %164 = vst [vmem:[%s145 + $0xe0] sm:$0xff] %v143
    %165 = vst [vmem:[%s145 + $0xe8] sm:$0x3] %v144
    %v166 = vld [vmem:[#allocation2 + $0x2] sm:$0xff]
    %v167 = vld [vmem:[#allocation2 + $0xa] sm:$0xff]
    %v168 = vld [vmem:[#allocation2 + $0x1a] sm:$0xff]
    %v169 = vld [vmem:[#allocation2 + $0x22] sm:$0xff]
    %v170 = vld [vmem:[#allocation2 + $0x32] sm:$0xff]
    %v171 = vld [vmem:[#allocation2 + $0x3a] sm:$0xff]
    %v172 = vld [vmem:[#allocation2 + $0x4a] sm:$0xff]
    %v173 = vld [vmem:[#allocation2 + $0x52] sm:$0xff]
    %v174 = vld [vmem:[#allocation2 + $0x62] sm:$0xff]
    %v175 = vld [vmem:[#allocation2 + $0x6a] sm:$0xff]
    %v176 = vld [vmem:[#allocation2 + $0x7a] sm:$0xff]
    %v177 = vld [vmem:[#allocation2 + $0x82] sm:$0xff]
    %v178 = vld [vmem:[#allocation2 + $0x92] sm:$0xff]
    %v179 = vld [vmem:[#allocation2 + $0x9a] sm:$0xff]
    %v180 = vld [vmem:[#allocation2 + $0xaa] sm:$0xff]
    %v181 = vld [vmem:[#allocation2 + $0xb2] sm:$0xff]
    %v182 = vld [vmem:[#allocation2 + $0xc2] sm:$0xff]
    %v183 = vld [vmem:[#allocation2 + $0xca] sm:$0xff]
    %v184 = vld [vmem:[#allocation2 + $0xda] sm:$0xff]
    %v185 = vld [vmem:[#allocation2 + $0xe2] sm:$0xff]
    %v186 = vld [vmem:[#allocation2 + $0xf2] sm:$0xff]
    %v187 = vld [vmem:[#allocation2 + $0xfa] sm:$0xff]
    %v188 = vld [vmem:[#allocation2 + $0x10a] sm:$0xff]
    %v189 = vld [vmem:[#allocation2 + $0x112] sm:$0xff]
    %v190 = vld [vmem:[#allocation2 + $0x122] sm:$0xff]
    %v191 = vld [vmem:[#allocation2 + $0x12a] sm:$0xff]
    %v192 = vld [vmem:[#allocation2 + $0x13a] sm:$0xff]
    %v193 = vld [vmem:[#allocation2 + $0x142] sm:$0xff]
    %v194 = vld [vmem:[#allocation2 + $0x152] sm:$0xff]
    %v195 = vld [vmem:[#allocation2 + $0x15a] sm:$0xff]
    %v196 = vld [vmem:[#allocation2 + $0x16a] sm:$0xff]
    %v197 = vld [vmem:[#allocation2 + $0x172] sm:$0xff]
    %v198 = vld [vmem:[#allocation2 + $0x182] sm:$0xff]
    %v199 = vld [vmem:[#allocation2 + $0x18a] sm:$0xff]
    %v200 = vld [vmem:[#allocation2 + $0x19a] sm:$0xff]
    %v201 = vld [vmem:[#allocation2 + $0x1a2] sm:$0xff]
    %v202 = vld [vmem:[#allocation2 + $0x1b2] sm:$0xff]
    %v203 = vld [vmem:[#allocation2 + $0x1ba] sm:$0xff]
    %v204 = vld [vmem:[#allocation2 + $0x1ca] sm:$0xff]
    %v205 = vld [vmem:[#allocation2 + $0x1d2] sm:$0xff]
    %v206 = vld [vmem:[#allocation2 + $0x1e2] sm:$0xff]
    %v207 = vld [vmem:[#allocation2 + $0x1ea] sm:$0xff]
    %v208 = vld [vmem:[#allocation2 + $0x1fa] sm:$0xff]
    %v209 = vld [vmem:[#allocation2 + $0x202] sm:$0xff]
    %v210 = vld [vmem:[#allocation2 + $0x3] sm:$0xff]
    %v211 = vld [vmem:[#allocation2 + $0xb] sm:$0xff]
    %v212 = vld [vmem:[#allocation2 + $0x1b] sm:$0xff]
    %v213 = vld [vmem:[#allocation2 + $0x23] sm:$0xff]
    %v214 = vld [vmem:[#allocation2 + $0x33] sm:$0xff]
    %v215 = vld [vmem:[#allocation2 + $0x3b] sm:$0xff]
    %v216 = vld [vmem:[#allocation2 + $0x4b] sm:$0xff]
    %v217 = vld [vmem:[#allocation2 + $0x53] sm:$0xff]
    %v218 = vld [vmem:[#allocation2 + $0x63] sm:$0xff]
    %v219 = vld [vmem:[#allocation2 + $0x6b] sm:$0xff]
    %v220 = vld [vmem:[#allocation2 + $0x7b] sm:$0xff]
    %v221 = vld [vmem:[#allocation2 + $0x83] sm:$0xff]
    %v222 = vld [vmem:[#allocation2 + $0x93] sm:$0xff]
    %v223 = vld [vmem:[#allocation2 + $0x9b] sm:$0xff]
    %v224 = vld [vmem:[#allocation2 + $0xab] sm:$0xff]
    %v225 = vld [vmem:[#allocation2 + $0xb3] sm:$0xff]
    %v226 = vld [vmem:[#allocation2 + $0xc3] sm:$0xff]
    %v227 = vld [vmem:[#allocation2 + $0xcb] sm:$0xff]
    %v228 = vld [vmem:[#allocation2 + $0xdb] sm:$0xff]
    %v229 = vld [vmem:[#allocation2 + $0xe3] sm:$0xff]
    %v230 = vld [vmem:[#allocation2 + $0xf3] sm:$0xff]
    %v231 = vld [vmem:[#allocation2 + $0xfb] sm:$0xff]
    %v232 = vld [vmem:[#allocation2 + $0x10b] sm:$0xff]
    %v233 = vld [vmem:[#allocation2 + $0x113] sm:$0xff]
    %v234 = vld [vmem:[#allocation2 + $0x123] sm:$0xff]
    %v235 = vld [vmem:[#allocation2 + $0x12b] sm:$0xff]
    %v236 = vld [vmem:[#allocation2 + $0x13b] sm:$0xff]
    %v237 = vld [vmem:[#allocation2 + $0x143] sm:$0xff]
    %v238 = vld [vmem:[#allocation2 + $0x153] sm:$0xff]
    %v239 = vld [vmem:[#allocation2 + $0x15b] sm:$0xff]
    %v240 = vld [vmem:[#allocation2 + $0x16b] sm:$0xff]
    %v241 = vld [vmem:[#allocation2 + $0x173] sm:$0xff]
    %v242 = vld [vmem:[#allocation2 + $0x183] sm:$0xff]
    %v243 = vld [vmem:[#allocation2 + $0x18b] sm:$0xff]
    %v244 = vld [vmem:[#allocation2 + $0x19b] sm:$0xff]
    %v245 = vld [vmem:[#allocation2 + $0x1a3] sm:$0xff]
    %v246 = vld [vmem:[#allocation2 + $0x1b3] sm:$0xff]
    %v247 = vld [vmem:[#allocation2 + $0x1bb] sm:$0xff]
    %v248 = vld [vmem:[#allocation2 + $0x1cb] sm:$0xff]
    %v249 = vld [vmem:[#allocation2 + $0x1d3] sm:$0xff]
    %v250 = vld [vmem:[#allocation2 + $0x1e3] sm:$0xff]
    %v251 = vld [vmem:[#allocation2 + $0x1eb] sm:$0xff]
    %v252 = vld [vmem:[#allocation2 + $0x1fb] sm:$0xff]
    %v253 = vld [vmem:[#allocation2 + $0x203] sm:$0xff]
    %v254 = vmax.f32 %v166, %v210
    %v255 = vmax.f32 %v167, %v211
    %v256 = vmax.f32 %v168, %v212
    %v257 = vmax.f32 %v169, %v213
    %v258 = vmax.f32 %v170, %v214
    %v259 = vmax.f32 %v171, %v215
    %v260 = vmax.f32 %v172, %v216
    %v261 = vmax.f32 %v173, %v217
    %v262 = vmax.f32 %v174, %v218
    %v263 = vmax.f32 %v175, %v219
    %v264 = vmax.f32 %v176, %v220
    %v265 = vmax.f32 %v177, %v221
    %v266 = vmax.f32 %v178, %v222
    %v267 = vmax.f32 %v179, %v223
    %v268 = vmax.f32 %v180, %v224
    %v269 = vmax.f32 %v181, %v225
    %v270 = vmax.f32 %v182, %v226
    %v271 = vmax.f32 %v183, %v227
    %v272 = vmax.f32 %v184, %v228
    %v273 = vmax.f32 %v185, %v229
    %v274 = vmax.f32 %v186, %v230
    %v275 = vmax.f32 %v187, %v231
    %v276 = vmax.f32 %v188, %v232
    %v277 = vmax.f32 %v189, %v233
    %v278 = vmax.f32 %v190, %v234
    %v279 = vmax.f32 %v191, %v235
    %v280 = vmax.f32 %v192, %v236
    %v281 = vmax.f32 %v193, %v237
    %v282 = vmax.f32 %v194, %v238
    %v283 = vmax.f32 %v195, %v239
    %v284 = vmax.f32 %v196, %v240
    %v285 = vmax.f32 %v197, %v241
    %v286 = vmax.f32 %v198, %v242
    %v287 = vmax.f32 %v199, %v243
    %v288 = vmax.f32 %v200, %v244
    %v289 = vmax.f32 %v201, %v245
    %v290 = vmax.f32 %v202, %v246
    %v291 = vmax.f32 %v203, %v247
    %v292 = vmax.f32 %v204, %v248
    %v293 = vmax.f32 %v205, %v249
    %v294 = vmax.f32 %v206, %v250
    %v295 = vmax.f32 %v207, %v251
    %v296 = vmax.f32 %v208, %v252
    %v297 = vmax.f32 %v209, %v253
    %v298 = vld [vmem:[#allocation2 + $0x4] sm:$0xff]
    %v299 = vld [vmem:[#allocation2 + $0xc] sm:$0xff]
    %v300 = vld [vmem:[#allocation2 + $0x1c] sm:$0xff]
    %v301 = vld [vmem:[#allocation2 + $0x24] sm:$0xff]
    %v302 = vld [vmem:[#allocation2 + $0x34] sm:$0xff]
    %v303 = vld [vmem:[#allocation2 + $0x3c] sm:$0xff]
    %v304 = vld [vmem:[#allocation2 + $0x4c] sm:$0xff]
    %v305 = vld [vmem:[#allocation2 + $0x54] sm:$0xff]
    %v306 = vld [vmem:[#allocation2 + $0x64] sm:$0xff]
    %v307 = vld [vmem:[#allocation2 + $0x6c] sm:$0xff]
    %v308 = vld [vmem:[#allocation2 + $0x7c] sm:$0xff]
    %v309 = vld [vmem:[#allocation2 + $0x84] sm:$0xff]
    %v310 = vld [vmem:[#allocation2 + $0x94] sm:$0xff]
    %v311 = vld [vmem:[#allocation2 + $0x9c] sm:$0xff]
    %v312 = vld [vmem:[#allocation2 + $0xac] sm:$0xff]
    %v313 = vld [vmem:[#allocation2 + $0xb4] sm:$0xff]
    %v314 = vld [vmem:[#allocation2 + $0xc4] sm:$0xff]
    %v315 = vld [vmem:[#allocation2 + $0xcc] sm:$0xff]
    %v316 = vld [vmem:[#allocation2 + $0xdc] sm:$0xff]
    %v317 = vld [vmem:[#allocation2 + $0xe4] sm:$0xff]
    %v318 = vld [vmem:[#allocation2 + $0xf4] sm:$0xff]
    %v319 = vld [vmem:[#allocation2 + $0xfc] sm:$0xff]
    %v320 = vld [vmem:[#allocation2 + $0x10c] sm:$0xff]
    %v321 = vld [vmem:[#allocation2 + $0x114] sm:$0xff]
    %v322 = vld [vmem:[#allocation2 + $0x124] sm:$0xff]
    %v323 = vld [vmem:[#allocation2 + $0x12c] sm:$0xff]
    %v324 = vld [vmem:[#allocation2 + $0x13c] sm:$0xff]
    %v325 = vld [vmem:[#allocation2 + $0x144] sm:$0xff]
    %v326 = vld [vmem:[#allocation2 + $0x154] sm:$0xff]
    %v327 = vld [vmem:[#allocation2 + $0x15c] sm:$0xff]
    %v328 = vld [vmem:[#allocation2 + $0x16c] sm:$0xff]
    %v329 = vld [vmem:[#allocation2 + $0x174] sm:$0xff]
    %v330 = vld [vmem:[#allocation2 + $0x184] sm:$0xff]
    %v331 = vld [vmem:[#allocation2 + $0x18c] sm:$0xff]
    %v332 = vld [vmem:[#allocation2 + $0x19c] sm:$0xff]
    %v333 = vld [vmem:[#allocation2 + $0x1a4] sm:$0xff]
    %v334 = vld [vmem:[#allocation2 + $0x1b4] sm:$0xff]
    %v335 = vld [vmem:[#allocation2 + $0x1bc] sm:$0xff]
    %v336 = vld [vmem:[#allocation2 + $0x1cc] sm:$0xff]
    %v337 = vld [vmem:[#allocation2 + $0x1d4] sm:$0xff]
    %v338 = vld [vmem:[#allocation2 + $0x1e4] sm:$0xff]
    %v339 = vld [vmem:[#allocation2 + $0x1ec] sm:$0xff]
    %v340 = vld [vmem:[#allocation2 + $0x1fc] sm:$0xff]
    %v341 = vld [vmem:[#allocation2 + $0x204] sm:$0xff]
    %v342 = vmax.f32 %v254, %v298
    %v343 = vmax.f32 %v255, %v299
    %v344 = vmax.f32 %v256, %v300
    %v345 = vmax.f32 %v257, %v301
    %v346 = vmax.f32 %v258, %v302
    %v347 = vmax.f32 %v259, %v303
    %v348 = vmax.f32 %v260, %v304
    %v349 = vmax.f32 %v261, %v305
    %v350 = vmax.f32 %v262, %v306
    %v351 = vmax.f32 %v263, %v307
    %v352 = vmax.f32 %v264, %v308
    %v353 = vmax.f32 %v265, %v309
    %v354 = vmax.f32 %v266, %v310
    %v355 = vmax.f32 %v267, %v311
    %v356 = vmax.f32 %v268, %v312
    %v357 = vmax.f32 %v269, %v313
    %v358 = vmax.f32 %v270, %v314
    %v359 = vmax.f32 %v271, %v315
    %v360 = vmax.f32 %v272, %v316
    %v361 = vmax.f32 %v273, %v317
    %v362 = vmax.f32 %v274, %v318
    %v363 = vmax.f32 %v275, %v319
    %v364 = vmax.f32 %v276, %v320
    %v365 = vmax.f32 %v277, %v321
    %v366 = vmax.f32 %v278, %v322
    %v367 = vmax.f32 %v279, %v323
    %v368 = vmax.f32 %v280, %v324
    %v369 = vmax.f32 %v281, %v325
    %v370 = vmax.f32 %v282, %v326
    %v371 = vmax.f32 %v283, %v327
    %v372 = vmax.f32 %v284, %v328
    %v373 = vmax.f32 %v285, %v329
    %v374 = vmax.f32 %v286, %v330
    %v375 = vmax.f32 %v287, %v331
    %v376 = vmax.f32 %v288, %v332
    %v377 = vmax.f32 %v289, %v333
    %v378 = vmax.f32 %v290, %v334
    %v379 = vmax.f32 %v291, %v335
    %v380 = vmax.f32 %v292, %v336
    %v381 = vmax.f32 %v293, %v337
    %v382 = vmax.f32 %v294, %v338
    %v383 = vmax.f32 %v295, %v339
    %v384 = vmax.f32 %v296, %v340
    %v385 = vmax.f32 %v297, %v341
    %v386 = vld [vmem:[#allocation2 + $0x5] sm:$0xff]
    %v387 = vld [vmem:[#allocation2 + $0xd] sm:$0xff]
    %v388 = vld [vmem:[#allocation2 + $0x1d] sm:$0xff]
    %v389 = vld [vmem:[#allocation2 + $0x25] sm:$0xff]
    %v390 = vld [vmem:[#allocation2 + $0x35] sm:$0xff]
    %v391 = vld [vmem:[#allocation2 + $0x3d] sm:$0xff]
    %v392 = vld [vmem:[#allocation2 + $0x4d] sm:$0xff]
    %v393 = vld [vmem:[#allocation2 + $0x55] sm:$0xff]
    %v394 = vld [vmem:[#allocation2 + $0x65] sm:$0xff]
    %v395 = vld [vmem:[#allocation2 + $0x6d] sm:$0xff]
    %v396 = vld [vmem:[#allocation2 + $0x7d] sm:$0xff]
    %v397 = vld [vmem:[#allocation2 + $0x85] sm:$0xff]
    %v398 = vld [vmem:[#allocation2 + $0x95] sm:$0xff]
    %v399 = vld [vmem:[#allocation2 + $0x9d] sm:$0xff]
    %v400 = vld [vmem:[#allocation2 + $0xad] sm:$0xff]
    %v401 = vld [vmem:[#allocation2 + $0xb5] sm:$0xff]
    %v402 = vld [vmem:[#allocation2 + $0xc5] sm:$0xff]
    %v403 = vld [vmem:[#allocation2 + $0xcd] sm:$0xff]
    %v404 = vld [vmem:[#allocation2 + $0xdd] sm:$0xff]
    %v405 = vld [vmem:[#allocation2 + $0xe5] sm:$0xff]
    %v406 = vld [vmem:[#allocation2 + $0xf5] sm:$0xff]
    %v407 = vld [vmem:[#allocation2 + $0xfd] sm:$0xff]
    %v408 = vld [vmem:[#allocation2 + $0x10d] sm:$0xff]
    %v409 = vld [vmem:[#allocation2 + $0x115] sm:$0xff]
    %v410 = vld [vmem:[#allocation2 + $0x125] sm:$0xff]
    %v411 = vld [vmem:[#allocation2 + $0x12d] sm:$0xff]
    %v412 = vld [vmem:[#allocation2 + $0x13d] sm:$0xff]
    %v413 = vld [vmem:[#allocation2 + $0x145] sm:$0xff]
    %v414 = vld [vmem:[#allocation2 + $0x155] sm:$0xff]
    %v415 = vld [vmem:[#allocation2 + $0x15d] sm:$0xff]
    %v416 = vld [vmem:[#allocation2 + $0x16d] sm:$0xff]
    %v417 = vld [vmem:[#allocation2 + $0x175] sm:$0xff]
    %v418 = vld [vmem:[#allocation2 + $0x185] sm:$0xff]
    %v419 = vld [vmem:[#allocation2 + $0x18d] sm:$0xff]
    %v420 = vld [vmem:[#allocation2 + $0x19d] sm:$0xff]
    %v421 = vld [vmem:[#allocation2 + $0x1a5] sm:$0xff]
    %v422 = vld [vmem:[#allocation2 + $0x1b5] sm:$0xff]
    %v423 = vld [vmem:[#allocation2 + $0x1bd] sm:$0xff]
    %v424 = vld [vmem:[#allocation2 + $0x1cd] sm:$0xff]
    %v425 = vld [vmem:[#allocation2 + $0x1d5] sm:$0xff]
    %v426 = vld [vmem:[#allocation2 + $0x1e5] sm:$0xff]
    %v427 = vld [vmem:[#allocation2 + $0x1ed] sm:$0xff]
    %v428 = vld [vmem:[#allocation2 + $0x1fd] sm:$0xff]
    %v429 = vld [vmem:[#allocation2 + $0x205] sm:$0xff]
    %v430 = vmax.f32 %v342, %v386
    %v431 = vmax.f32 %v343, %v387
    %v432 = vmax.f32 %v344, %v388
    %v433 = vmax.f32 %v345, %v389
    %v434 = vmax.f32 %v346, %v390
    %v435 = vmax.f32 %v347, %v391
    %v436 = vmax.f32 %v348, %v392
    %v437 = vmax.f32 %v349, %v393
    %v438 = vmax.f32 %v350, %v394
    %v439 = vmax.f32 %v351, %v395
    %v440 = vmax.f32 %v352, %v396
    %v441 = vmax.f32 %v353, %v397
    %v442 = vmax.f32 %v354, %v398
    %v443 = vmax.f32 %v355, %v399
    %v444 = vmax.f32 %v356, %v400
    %v445 = vmax.f32 %v357, %v401
    %v446 = vmax.f32 %v358, %v402
    %v447 = vmax.f32 %v359, %v403
    %v448 = vmax.f32 %v360, %v404
    %v449 = vmax.f32 %v361, %v405
    %v450 = vmax.f32 %v362, %v406
    %v451 = vmax.f32 %v363, %v407
    %v452 = vmax.f32 %v364, %v408
    %v453 = vmax.f32 %v365, %v409
    %v454 = vmax.f32 %v366, %v410
    %v455 = vmax.f32 %v367, %v411
    %v456 = vmax.f32 %v368, %v412
    %v457 = vmax.f32 %v369, %v413
    %v458 = vmax.f32 %v370, %v414
    %v459 = vmax.f32 %v371, %v415
    %v460 = vmax.f32 %v372, %v416
    %v461 = vmax.f32 %v373, %v417
    %v462 = vmax.f32 %v374, %v418
    %v463 = vmax.f32 %v375, %v419
    %v464 = vmax.f32 %v376, %v420
    %v465 = vmax.f32 %v377, %v421
    %v466 = vmax.f32 %v378, %v422
    %v467 = vmax.f32 %v379, %v423
    %v468 = vmax.f32 %v380, %v424
    %v469 = vmax.f32 %v381, %v425
    %v470 = vmax.f32 %v382, %v426
    %v471 = vmax.f32 %v383, %v427
    %v472 = vmax.f32 %v384, %v428
    %v473 = vmax.f32 %v385, %v429
    %v474 = vld [vmem:[#allocation2 + $0x6] sm:$0xff]
    %v475 = vld [vmem:[#allocation2 + $0xe] sm:$0xff]
    %v476 = vld [vmem:[#allocation2 + $0x1e] sm:$0xff]
    %v477 = vld [vmem:[#allocation2 + $0x26] sm:$0xff]
    %v478 = vld [vmem:[#allocation2 + $0x36] sm:$0xff]
    %v479 = vld [vmem:[#allocation2 + $0x3e] sm:$0xff]
    %v480 = vld [vmem:[#allocation2 + $0x4e] sm:$0xff]
    %v481 = vld [vmem:[#allocation2 + $0x56] sm:$0xff]
    %v482 = vld [vmem:[#allocation2 + $0x66] sm:$0xff]
    %v483 = vld [vmem:[#allocation2 + $0x6e] sm:$0xff]
    %v484 = vld [vmem:[#allocation2 + $0x7e] sm:$0xff]
    %v485 = vld [vmem:[#allocation2 + $0x86] sm:$0xff]
    %v486 = vld [vmem:[#allocation2 + $0x96] sm:$0xff]
    %v487 = vld [vmem:[#allocation2 + $0x9e] sm:$0xff]
    %v488 = vld [vmem:[#allocation2 + $0xae] sm:$0xff]
    %v489 = vld [vmem:[#allocation2 + $0xb6] sm:$0xff]
    %v490 = vld [vmem:[#allocation2 + $0xc6] sm:$0xff]
    %v491 = vld [vmem:[#allocation2 + $0xce] sm:$0xff]
    %v492 = vld [vmem:[#allocation2 + $0xde] sm:$0xff]
    %v493 = vld [vmem:[#allocation2 + $0xe6] sm:$0xff]
    %v494 = vld [vmem:[#allocation2 + $0xf6] sm:$0xff]
    %v495 = vld [vmem:[#allocation2 + $0xfe] sm:$0xff]
    %v496 = vld [vmem:[#allocation2 + $0x10e] sm:$0xff]
    %v497 = vld [vmem:[#allocation2 + $0x116] sm:$0xff]
    %v498 = vld [vmem:[#allocation2 + $0x126] sm:$0xff]
    %v499 = vld [vmem:[#allocation2 + $0x12e] sm:$0xff]
    %v500 = vld [vmem:[#allocation2 + $0x13e] sm:$0xff]
    %v501 = vld [vmem:[#allocation2 + $0x146] sm:$0xff]
    %v502 = vld [vmem:[#allocation2 + $0x156] sm:$0xff]
    %v503 = vld [vmem:[#allocation2 + $0x15e] sm:$0xff]
    %v504 = vld [vmem:[#allocation2 + $0x16e] sm:$0xff]
    %v505 = vld [vmem:[#allocation2 + $0x176] sm:$0xff]
    %v506 = vld [vmem:[#allocation2 + $0x186] sm:$0xff]
    %v507 = vld [vmem:[#allocation2 + $0x18e] sm:$0xff]
    %v508 = vld [vmem:[#allocation2 + $0x19e] sm:$0xff]
    %v509 = vld [vmem:[#allocation2 + $0x1a6] sm:$0xff]
    %v510 = vld [vmem:[#allocation2 + $0x1b6] sm:$0xff]
    %v511 = vld [vmem:[#allocation2 + $0x1be] sm:$0xff]
    %v512 = vld [vmem:[#allocation2 + $0x1ce] sm:$0xff]
    %v513 = vld [vmem:[#allocation2 + $0x1d6] sm:$0xff]
    %v514 = vld [vmem:[#allocation2 + $0x1e6] sm:$0xff]
    %v515 = vld [vmem:[#allocation2 + $0x1ee] sm:$0xff]
    %v516 = vld [vmem:[#allocation2 + $0x1fe] sm:$0xff]
    %v517 = vld [vmem:[#allocation2 + $0x206] sm:$0xff]
    %v518 = vmax.f32 %v430, %v474
    %v519 = vmax.f32 %v431, %v475
    %v520 = vmax.f32 %v432, %v476
    %v521 = vmax.f32 %v433, %v477
    %v522 = vmax.f32 %v434, %v478
    %v523 = vmax.f32 %v435, %v479
    %v524 = vmax.f32 %v436, %v480
    %v525 = vmax.f32 %v437, %v481
    %v526 = vmax.f32 %v438, %v482
    %v527 = vmax.f32 %v439, %v483
    %v528 = vmax.f32 %v440, %v484
    %v529 = vmax.f32 %v441, %v485
    %v530 = vmax.f32 %v442, %v486
    %v531 = vmax.f32 %v443, %v487
    %v532 = vmax.f32 %v444, %v488
    %v533 = vmax.f32 %v445, %v489
    %v534 = vmax.f32 %v446, %v490
    %v535 = vmax.f32 %v447, %v491
    %v536 = vmax.f32 %v448, %v492
    %v537 = vmax.f32 %v449, %v493
    %v538 = vmax.f32 %v450, %v494
    %v539 = vmax.f32 %v451, %v495
    %v540 = vmax.f32 %v452, %v496
    %v541 = vmax.f32 %v453, %v497
    %v542 = vmax.f32 %v454, %v498
    %v543 = vmax.f32 %v455, %v499
    %v544 = vmax.f32 %v456, %v500
    %v545 = vmax.f32 %v457, %v501
    %v546 = vmax.f32 %v458, %v502
    %v547 = vmax.f32 %v459, %v503
    %v548 = vmax.f32 %v460, %v504
    %v549 = vmax.f32 %v461, %v505
    %v550 = vmax.f32 %v462, %v506
    %v551 = vmax.f32 %v463, %v507
    %v552 = vmax.f32 %v464, %v508
    %v553 = vmax.f32 %v465, %v509
    %v554 = vmax.f32 %v466, %v510
    %v555 = vmax.f32 %v467, %v511
    %v556 = vmax.f32 %v468, %v512
    %v557 = vmax.f32 %v469, %v513
    %v558 = vmax.f32 %v470, %v514
    %v559 = vmax.f32 %v471, %v515
    %v560 = vmax.f32 %v472, %v516
    %v561 = vmax.f32 %v473, %v517
    %v562 = vld [vmem:[#allocation2 + $0x7] sm:$0xff]
    %v563 = vld [vmem:[#allocation2 + $0xf] sm:$0xff]
    %v564 = vld [vmem:[#allocation2 + $0x1f] sm:$0xff]
    %v565 = vld [vmem:[#allocation2 + $0x27] sm:$0xff]
    %v566 = vld [vmem:[#allocation2 + $0x37] sm:$0xff]
    %v567 = vld [vmem:[#allocation2 + $0x3f] sm:$0xff]
    %v568 = vld [vmem:[#allocation2 + $0x4f] sm:$0xff]
    %v569 = vld [vmem:[#allocation2 + $0x57] sm:$0xff]
    %v570 = vld [vmem:[#allocation2 + $0x67] sm:$0xff]
    %v571 = vld [vmem:[#allocation2 + $0x6f] sm:$0xff]
    %v572 = vld [vmem:[#allocation2 + $0x7f] sm:$0xff]
    %v573 = vld [vmem:[#allocation2 + $0x87] sm:$0xff]
    %v574 = vld [vmem:[#allocation2 + $0x97] sm:$0xff]
    %v575 = vld [vmem:[#allocation2 + $0x9f] sm:$0xff]
    %v576 = vld [vmem:[#allocation2 + $0xaf] sm:$0xff]
    %v577 = vld [vmem:[#allocation2 + $0xb7] sm:$0xff]
    %v578 = vld [vmem:[#allocation2 + $0xc7] sm:$0xff]
    %v579 = vld [vmem:[#allocation2 + $0xcf] sm:$0xff]
    %v580 = vld [vmem:[#allocation2 + $0xdf] sm:$0xff]
    %v581 = vld [vmem:[#allocation2 + $0xe7] sm:$0xff]
    %v582 = vld [vmem:[#allocation2 + $0xf7] sm:$0xff]
    %v583 = vld [vmem:[#allocation2 + $0xff] sm:$0xff]
    %v584 = vld [vmem:[#allocation2 + $0x10f] sm:$0xff]
    %v585 = vld [vmem:[#allocation2 + $0x117] sm:$0xff]
    %v586 = vld [vmem:[#allocation2 + $0x127] sm:$0xff]
    %v587 = vld [vmem:[#allocation2 + $0x12f] sm:$0xff]
    %v588 = vld [vmem:[#allocation2 + $0x13f] sm:$0xff]
    %v589 = vld [vmem:[#allocation2 + $0x147] sm:$0xff]
    %v590 = vld [vmem:[#allocation2 + $0x157] sm:$0xff]
    %v591 = vld [vmem:[#allocation2 + $0x15f] sm:$0xff]
    %v592 = vld [vmem:[#allocation2 + $0x16f] sm:$0xff]
    %v593 = vld [vmem:[#allocation2 + $0x177] sm:$0xff]
    %v594 = vld [vmem:[#allocation2 + $0x187] sm:$0xff]
    %v595 = vld [vmem:[#allocation2 + $0x18f] sm:$0xff]
    %v596 = vld [vmem:[#allocation2 + $0x19f] sm:$0xff]
    %v597 = vld [vmem:[#allocation2 + $0x1a7] sm:$0xff]
    %v598 = vld [vmem:[#allocation2 + $0x1b7] sm:$0xff]
    %v599 = vld [vmem:[#allocation2 + $0x1bf] sm:$0xff]
    %v600 = vld [vmem:[#allocation2 + $0x1cf] sm:$0xff]
    %v601 = vld [vmem:[#allocation2 + $0x1d7] sm:$0xff]
    %v602 = vld [vmem:[#allocation2 + $0x1e7] sm:$0xff]
    %v603 = vld [vmem:[#allocation2 + $0x1ef] sm:$0xff]
    %v604 = vld [vmem:[#allocation2 + $0x1ff] sm:$0xff]
    %v605 = vld [vmem:[#allocation2 + $0x207] sm:$0xff]
    %v606 = vmax.f32 %v518, %v562
    %v607 = vmax.f32 %v519, %v563
    %v608 = vmax.f32 %v520, %v564
    %v609 = vmax.f32 %v521, %v565
    %v610 = vmax.f32 %v522, %v566
    %v611 = vmax.f32 %v523, %v567
    %v612 = vmax.f32 %v524, %v568
    %v613 = vmax.f32 %v525, %v569
    %v614 = vmax.f32 %v526, %v570
    %v615 = vmax.f32 %v527, %v571
    %v616 = vmax.f32 %v528, %v572
    %v617 = vmax.f32 %v529, %v573
    %v618 = vmax.f32 %v530, %v574
    %v619 = vmax.f32 %v531, %v575
    %v620 = vmax.f32 %v532, %v576
    %v621 = vmax.f32 %v533, %v577
    %v622 = vmax.f32 %v534, %v578
    %v623 = vmax.f32 %v535, %v579
    %v624 = vmax.f32 %v536, %v580
    %v625 = vmax.f32 %v537, %v581
    %v626 = vmax.f32 %v538, %v582
    %v627 = vmax.f32 %v539, %v583
    %v628 = vmax.f32 %v540, %v584
    %v629 = vmax.f32 %v541, %v585
    %v630 = vmax.f32 %v542, %v586
    %v631 = vmax.f32 %v543, %v587
    %v632 = vmax.f32 %v544, %v588
    %v633 = vmax.f32 %v545, %v589
    %v634 = vmax.f32 %v546, %v590
    %v635 = vmax.f32 %v547, %v591
    %v636 = vmax.f32 %v548, %v592
    %v637 = vmax.f32 %v549, %v593
    %v638 = vmax.f32 %v550, %v594
    %v639 = vmax.f32 %v551, %v595
    %v640 = vmax.f32 %v552, %v596
    %v641 = vmax.f32 %v553, %v597
    %v642 = vmax.f32 %v554, %v598
    %v643 = vmax.f32 %v555, %v599
    %v644 = vmax.f32 %v556, %v600
    %v645 = vmax.f32 %v557, %v601
    %v646 = vmax.f32 %v558, %v602
    %v647 = vmax.f32 %v559, %v603
    %v648 = vmax.f32 %v560, %v604
    %v649 = vmax.f32 %v561, %v605
    %v650 = vld [vmem:[#allocation2 + $0x8] sm:$0xff]
    %v651 = vld [vmem:[#allocation2 + $0x10] sm:$0xff]
    %v652 = vld [vmem:[#allocation2 + $0x20] sm:$0xff]
    %v653 = vld [vmem:[#allocation2 + $0x28] sm:$0xff]
    %v654 = vld [vmem:[#allocation2 + $0x38] sm:$0xff]
    %v655 = vld [vmem:[#allocation2 + $0x40] sm:$0xff]
    %v656 = vld [vmem:[#allocation2 + $0x50] sm:$0xff]
    %v657 = vld [vmem:[#allocation2 + $0x58] sm:$0xff]
    %v658 = vld [vmem:[#allocation2 + $0x68] sm:$0xff]
    %v659 = vld [vmem:[#allocation2 + $0x70] sm:$0xff]
    %v660 = vld [vmem:[#allocation2 + $0x80] sm:$0xff]
    %v661 = vld [vmem:[#allocation2 + $0x88] sm:$0xff]
    %v662 = vld [vmem:[#allocation2 + $0x98] sm:$0xff]
    %v663 = vld [vmem:[#allocation2 + $0xa0] sm:$0xff]
    %v664 = vld [vmem:[#allocation2 + $0xb0] sm:$0xff]
    %v665 = vld [vmem:[#allocation2 + $0xb8] sm:$0xff]
    %v666 = vld [vmem:[#allocation2 + $0xc8] sm:$0xff]
    %v667 = vld [vmem:[#allocation2 + $0xd0] sm:$0xff]
    %v668 = vld [vmem:[#allocation2 + $0xe0] sm:$0xff]
    %v669 = vld [vmem:[#allocation2 + $0xe8] sm:$0xff]
    %v670 = vld [vmem:[#allocation2 + $0xf8] sm:$0xff]
    %v671 = vld [vmem:[#allocation2 + $0x100] sm:$0xff]
    %v672 = vld [vmem:[#allocation2 + $0x110] sm:$0xff]
    %v673 = vld [vmem:[#allocation2 + $0x118] sm:$0xff]
    %v674 = vld [vmem:[#allocation2 + $0x128] sm:$0xff]
    %v675 = vld [vmem:[#allocation2 + $0x130] sm:$0xff]
    %v676 = vld [vmem:[#allocation2 + $0x140] sm:$0xff]
    %v677 = vld [vmem:[#allocation2 + $0x148] sm:$0xff]
    %v678 = vld [vmem:[#allocation2 + $0x158] sm:$0xff]
    %v679 = vld [vmem:[#allocation2 + $0x160] sm:$0xff]
    %v680 = vld [vmem:[#allocation2 + $0x170] sm:$0xff]
    %v681 = vld [vmem:[#allocation2 + $0x178] sm:$0xff]
    %v682 = vld [vmem:[#allocation2 + $0x188] sm:$0xff]
    %v683 = vld [vmem:[#allocation2 + $0x190] sm:$0xff]
    %v684 = vld [vmem:[#allocation2 + $0x1a0] sm:$0xff]
    %v685 = vld [vmem:[#allocation2 + $0x1a8] sm:$0xff]
    %v686 = vld [vmem:[#allocation2 + $0x1b8] sm:$0xff]
    %v687 = vld [vmem:[#allocation2 + $0x1c0] sm:$0xff]
    %v688 = vld [vmem:[#allocation2 + $0x1d0] sm:$0xff]
    %v689 = vld [vmem:[#allocation2 + $0x1d8] sm:$0xff]
    %v690 = vld [vmem:[#allocation2 + $0x1e8] sm:$0xff]
    %v691 = vld [vmem:[#allocation2 + $0x1f0] sm:$0xff]
    %v692 = vld [vmem:[#allocation2 + $0x200] sm:$0xff]
    %v693 = vld [vmem:[#allocation2 + $0x208] sm:$0xff]
    %v694 = vmax.f32 %v606, %v650
    %v695 = vmax.f32 %v607, %v651
    %v696 = vmax.f32 %v608, %v652
    %v697 = vmax.f32 %v609, %v653
    %v698 = vmax.f32 %v610, %v654
    %v699 = vmax.f32 %v611, %v655
    %v700 = vmax.f32 %v612, %v656
    %v701 = vmax.f32 %v613, %v657
    %v702 = vmax.f32 %v614, %v658
    %v703 = vmax.f32 %v615, %v659
    %v704 = vmax.f32 %v616, %v660
    %v705 = vmax.f32 %v617, %v661
    %v706 = vmax.f32 %v618, %v662
    %v707 = vmax.f32 %v619, %v663
    %v708 = vmax.f32 %v620, %v664
    %v709 = vmax.f32 %v621, %v665
    %v710 = vmax.f32 %v622, %v666
    %v711 = vmax.f32 %v623, %v667
    %v712 = vmax.f32 %v624, %v668
    %v713 = vmax.f32 %v625, %v669
    %v714 = vmax.f32 %v626, %v670
    %v715 = vmax.f32 %v627, %v671
    %v716 = vmax.f32 %v628, %v672
    %v717 = vmax.f32 %v629, %v673
    %v718 = vmax.f32 %v630, %v674
    %v719 = vmax.f32 %v631, %v675
    %v720 = vmax.f32 %v632, %v676
    %v721 = vmax.f32 %v633, %v677
    %v722 = vmax.f32 %v634, %v678
    %v723 = vmax.f32 %v635, %v679
    %v724 = vmax.f32 %v636, %v680
    %v725 = vmax.f32 %v637, %v681
    %v726 = vmax.f32 %v638, %v682
    %v727 = vmax.f32 %v639, %v683
    %v728 = vmax.f32 %v640, %v684
    %v729 = vmax.f32 %v641, %v685
    %v730 = vmax.f32 %v642, %v686
    %v731 = vmax.f32 %v643, %v687
    %v732 = vmax.f32 %v644, %v688
    %v733 = vmax.f32 %v645, %v689
    %v734 = vmax.f32 %v646, %v690
    %v735 = vmax.f32 %v647, %v691
    %v736 = vmax.f32 %v648, %v692
    %v737 = vmax.f32 %v649, %v693
    %v738 = vmax.f32 %v694, %v696
    %v739 = vmax.f32 %v695, %v697
    %v740 = vmax.f32 %v696, %v698
    %v741 = vmax.f32 %v697, %v699
    %v742 = vmax.f32 %v698, %v700
    %v743 = vmax.f32 %v699, %v701
    %v744 = vmax.f32 %v700, %v702
    %v745 = vmax.f32 %v701, %v703
    %v746 = vmax.f32 %v702, %v704
    %v747 = vmax.f32 %v703, %v705
    %v748 = vmax.f32 %v704, %v706
    %v749 = vmax.f32 %v705, %v707
    %v750 = vmax.f32 %v706, %v708
    %v751 = vmax.f32 %v707, %v709
    %v752 = vmax.f32 %v708, %v710
    %v753 = vmax.f32 %v709, %v711
    %v754 = vmax.f32 %v710, %v712
    %v755 = vmax.f32 %v711, %v713
    %v756 = vmax.f32 %v712, %v714
    %v757 = vmax.f32 %v713, %v715
    %v758 = vmax.f32 %v714, %v716
    %v759 = vmax.f32 %v715, %v717
    %v760 = vmax.f32 %v716, %v718
    %v761 = vmax.f32 %v717, %v719
    %v762 = vmax.f32 %v718, %v720
    %v763 = vmax.f32 %v719, %v721
    %v764 = vmax.f32 %v720, %v722
    %v765 = vmax.f32 %v721, %v723
    %v766 = vmax.f32 %v722, %v724
    %v767 = vmax.f32 %v723, %v725
    %v768 = vmax.f32 %v724, %v726
    %v769 = vmax.f32 %v725, %v727
    %v770 = vmax.f32 %v738, %v698
    %v771 = vmax.f32 %v739, %v699
    %v772 = vmax.f32 %v740, %v700
    %v773 = vmax.f32 %v741, %v701
    %v774 = vmax.f32 %v742, %v702
    %v775 = vmax.f32 %v743, %v703
    %v776 = vmax.f32 %v744, %v704
    %v777 = vmax.f32 %v745, %v705
    %v778 = vmax.f32 %v746, %v706
    %v779 = vmax.f32 %v747, %v707
    %v780 = vmax.f32 %v748, %v708
    %v781 = vmax.f32 %v749, %v709
    %v782 = vmax.f32 %v750, %v710
    %v783 = vmax.f32 %v751, %v711
    %v784 = vmax.f32 %v752, %v712
    %v785 = vmax.f32 %v753, %v713
    %v786 = vmax.f32 %v754, %v714
    %v787 = vmax.f32 %v755, %v715
    %v788 = vmax.f32 %v756, %v716
    %v789 = vmax.f32 %v757, %v717
    %v790 = vmax.f32 %v758, %v718
    %v791 = vmax.f32 %v759, %v719
    %v792 = vmax.f32 %v760, %v720
    %v793 = vmax.f32 %v761, %v721
    %v794 = vmax.f32 %v762, %v722
    %v795 = vmax.f32 %v763, %v723
    %v796 = vmax.f32 %v764, %v724
    %v797 = vmax.f32 %v765, %v725
    %v798 = vmax.f32 %v766, %v726
    %v799 = vmax.f32 %v767, %v727
    %v800 = vmax.f32 %v768, %v728
    %v801 = vmax.f32 %v769, %v729
    %v802 = vmax.f32 %v770, %v700
    %v803 = vmax.f32 %v771, %v701
    %v804 = vmax.f32 %v772, %v702
    %v805 = vmax.f32 %v773, %v703
    %v806 = vmax.f32 %v774, %v704
    %v807 = vmax.f32 %v775, %v705
    %v808 = vmax.f32 %v776, %v706
    %v809 = vmax.f32 %v777, %v707
    %v810 = vmax.f32 %v778, %v708
    %v811 = vmax.f32 %v779, %v709
    %v812 = vmax.f32 %v780, %v710
    %v813 = vmax.f32 %v781, %v711
    %v814 = vmax.f32 %v782, %v712
    %v815 = vmax.f32 %v783, %v713
    %v816 = vmax.f32 %v784, %v714
    %v817 = vmax.f32 %v785, %v715
    %v818 = vmax.f32 %v786, %v716
    %v819 = vmax.f32 %v787, %v717
    %v820 = vmax.f32 %v788, %v718
    %v821 = vmax.f32 %v789, %v719
    %v822 = vmax.f32 %v790, %v720
    %v823 = vmax.f32 %v791, %v721
    %v824 = vmax.f32 %v792, %v722
    %v825 = vmax.f32 %v793, %v723
    %v826 = vmax.f32 %v794, %v724
    %v827 = vmax.f32 %v795, %v725
    %v828 = vmax.f32 %v796, %v726
    %v829 = vmax.f32 %v797, %v727
    %v830 = vmax.f32 %v798, %v728
    %v831 = vmax.f32 %v799, %v729
    %v832 = vmax.f32 %v800, %v730
    %v833 = vmax.f32 %v801, %v731
    %v834 = vmax.f32 %v802, %v702
    %v835 = vmax.f32 %v803, %v703
    %v836 = vmax.f32 %v804, %v704
    %v837 = vmax.f32 %v805, %v705
    %v838 = vmax.f32 %v806, %v706
    %v839 = vmax.f32 %v807, %v707
    %v840 = vmax.f32 %v808, %v708
    %v841 = vmax.f32 %v809, %v709
    %v842 = vmax.f32 %v810, %v710
    %v843 = vmax.f32 %v811, %v711
    %v844 = vmax.f32 %v812, %v712
    %v845 = vmax.f32 %v813, %v713
    %v846 = vmax.f32 %v814, %v714
    %v847 = vmax.f32 %v815, %v715
    %v848 = vmax.f32 %v816, %v716
    %v849 = vmax.f32 %v817, %v717
    %v850 = vmax.f32 %v818, %v718
    %v851 = vmax.f32 %v819, %v719
    %v852 = vmax.f32 %v820, %v720
    %v853 = vmax.f32 %v821, %v721
    %v854 = vmax.f32 %v822, %v722
    %v855 = vmax.f32 %v823, %v723
    %v856 = vmax.f32 %v824, %v724
    %v857 = vmax.f32 %v825, %v725
    %v858 = vmax.f32 %v826, %v726
    %v859 = vmax.f32 %v827, %v727
    %v860 = vmax.f32 %v828, %v728
    %v861 = vmax.f32 %v829, %v729
    %v862 = vmax.f32 %v830, %v730
    %v863 = vmax.f32 %v831, %v731
    %v864 = vmax.f32 %v832, %v732
    %v865 = vmax.f32 %v833, %v733
    %v866 = vmax.f32 %v834, %v704
    %v867 = vmax.f32 %v835, %v705
    %v868 = vmax.f32 %v836, %v706
    %v869 = vmax.f32 %v837, %v707
    %v870 = vmax.f32 %v838, %v708
    %v871 = vmax.f32 %v839, %v709
    %v872 = vmax.f32 %v840, %v710
    %v873 = vmax.f32 %v841, %v711
    %v874 = vmax.f32 %v842, %v712
    %v875 = vmax.f32 %v843, %v713
    %v876 = vmax.f32 %v844, %v714
    %v877 = vmax.f32 %v845, %v715
    %v878 = vmax.f32 %v846, %v716
    %v879 = vmax.f32 %v847, %v717
    %v880 = vmax.f32 %v848, %v718
    %v881 = vmax.f32 %v849, %v719
    %v882 = vmax.f32 %v850, %v720
    %v883 = vmax.f32 %v851, %v721
    %v884 = vmax.f32 %v852, %v722
    %v885 = vmax.f32 %v853, %v723
    %v886 = vmax.f32 %v854, %v724
    %v887 = vmax.f32 %v855, %v725
    %v888 = vmax.f32 %v856, %v726
    %v889 = vmax.f32 %v857, %v727
    %v890 = vmax.f32 %v858, %v728
    %v891 = vmax.f32 %v859, %v729
    %v892 = vmax.f32 %v860, %v730
    %v893 = vmax.f32 %v861, %v731
    %v894 = vmax.f32 %v862, %v732
    %v895 = vmax.f32 %v863, %v733
    %v896 = vmax.f32 %v864, %v734
    %v897 = vmax.f32 %v865, %v735
    %v898 = vmax.f32 %v866, %v706
    %v899 = vmax.f32 %v867, %v707
    %v900 = vmax.f32 %v868, %v708
    %v901 = vmax.f32 %v869, %v709
    %v902 = vmax.f32 %v870, %v710
    %v903 = vmax.f32 %v871, %v711
    %v904 = vmax.f32 %v872, %v712
    %v905 = vmax.f32 %v873, %v713
    %v906 = vmax.f32 %v874, %v714
    %v907 = vmax.f32 %v875, %v715
    %v908 = vmax.f32 %v876, %v716
    %v909 = vmax.f32 %v877, %v717
    %v910 = vmax.f32 %v878, %v718
    %v911 = vmax.f32 %v879, %v719
    %v912 = vmax.f32 %v880, %v720
    %v913 = vmax.f32 %v881, %v721
    %v914 = vmax.f32 %v882, %v722
    %v915 = vmax.f32 %v883, %v723
    %v916 = vmax.f32 %v884, %v724
    %v917 = vmax.f32 %v885, %v725
    %v918 = vmax.f32 %v886, %v726
    %v919 = vmax.f32 %v887, %v727
    %v920 = vmax.f32 %v888, %v728
    %v921 = vmax.f32 %v889, %v729
    %v922 = vmax.f32 %v890, %v730
    %v923 = vmax.f32 %v891, %v731
    %v924 = vmax.f32 %v892, %v732
    %v925 = vmax.f32 %v893, %v733
    %v926 = vmax.f32 %v894, %v734
    %v927 = vmax.f32 %v895, %v735
    %v928 = vmax.f32 %v896, %v736
    %v929 = vmax.f32 %v897, %v737
    %v930 = vsub.f32 1.0, %v898
    %v931 = vsub.f32 1.0, %v899
    %v932 = vsub.f32 1.0, %v900
    %v933 = vsub.f32 1.0, %v901
    %v934 = vsub.f32 1.0, %v902
    %v935 = vsub.f32 1.0, %v903
    %v936 = vsub.f32 1.0, %v904
    %v937 = vsub.f32 1.0, %v905
    %v938 = vsub.f32 1.0, %v906
    %v939 = vsub.f32 1.0, %v907
    %v940 = vsub.f32 1.0, %v908
    %v941 = vsub.f32 1.0, %v909
    %v942 = vsub.f32 1.0, %v910
    %v943 = vsub.f32 1.0, %v911
    %v944 = vsub.f32 1.0, %v912
    %v945 = vsub.f32 1.0, %v913
    %v946 = vsub.f32 1.0, %v914
    %v947 = vsub.f32 1.0, %v915
    %v948 = vsub.f32 1.0, %v916
    %v949 = vsub.f32 1.0, %v917
    %v950 = vsub.f32 1.0, %v918
    %v951 = vsub.f32 1.0, %v919
    %v952 = vsub.f32 1.0, %v920
    %v953 = vsub.f32 1.0, %v921
    %v954 = vsub.f32 1.0, %v922
    %v955 = vsub.f32 1.0, %v923
    %v956 = vsub.f32 1.0, %v924
    %v957 = vsub.f32 1.0, %v925
    %v958 = vsub.f32 1.0, %v926
    %v959 = vsub.f32 1.0, %v927
    %v960 = vsub.f32 1.0, %v928
    %v961 = vsub.f32 1.0, %v929
    %v962 = vmax.f32 %v930, -128.0
    %v963 = vmax.f32 %v931, -128.0
    %v964 = vmax.f32 %v932, -128.0
    %v965 = vmax.f32 %v933, -128.0
    %v966 = vmax.f32 %v934, -128.0
    %v967 = vmax.f32 %v935, -128.0
    %v968 = vmax.f32 %v936, -128.0
    %v969 = vmax.f32 %v937, -128.0
    %v970 = vmax.f32 %v938, -128.0
    %v971 = vmax.f32 %v939, -128.0
    %v972 = vmax.f32 %v940, -128.0
    %v973 = vmax.f32 %v941, -128.0
    %v974 = vmax.f32 %v942, -128.0
    %v975 = vmax.f32 %v943, -128.0
    %v976 = vmax.f32 %v944, -128.0
    %v977 = vmax.f32 %v945, -128.0
    %v978 = vmax.f32 %v946, -128.0
    %v979 = vmax.f32 %v947, -128.0
    %v980 = vmax.f32 %v948, -128.0
    %v981 = vmax.f32 %v949, -128.0
    %v982 = vmax.f32 %v950, -128.0
    %v983 = vmax.f32 %v951, -128.0
    %v984 = vmax.f32 %v952, -128.0
    %v985 = vmax.f32 %v953, -128.0
    %v986 = vmax.f32 %v954, -128.0
    %v987 = vmax.f32 %v955, -128.0
    %v988 = vmax.f32 %v956, -128.0
    %v989 = vmax.f32 %v957, -128.0
    %v990 = vmax.f32 %v958, -128.0
    %v991 = vmax.f32 %v959, -128.0
    %v992 = vmax.f32 %v960, -128.0
    %v993 = vmax.f32 %v961, -128.0
    %v994 = vmin.f32 %v962, 127.0
    %v995 = vmin.f32 %v963, 127.0
    %v996 = vmin.f32 %v964, 127.0
    %v997 = vmin.f32 %v965, 127.0
    %v998 = vmin.f32 %v966, 127.0
    %v999 = vmin.f32 %v967, 127.0
    %v1000 = vmin.f32 %v968, 127.0
    %v1001 = vmin.f32 %v969, 127.0
    %v1002 = vmin.f32 %v970, 127.0
    %v1003 = vmin.f32 %v971, 127.0
    %v1004 = vmin.f32 %v972, 127.0
    %v1005 = vmin.f32 %v973, 127.0
    %v1006 = vmin.f32 %v974, 127.0
    %v1007 = vmin.f32 %v975, 127.0
    %v1008 = vmin.f32 %v976, 127.0
    %v1009 = vmin.f32 %v977, 127.0
    %v1010 = vmin.f32 %v978, 127.0
    %v1011 = vmin.f32 %v979, 127.0
    %v1012 = vmin.f32 %v980, 127.0
    %v1013 = vmin.f32 %v981, 127.0
    %v1014 = vmin.f32 %v982, 127.0
    %v1015 = vmin.f32 %v983, 127.0
    %v1016 = vmin.f32 %v984, 127.0
    %v1017 = vmin.f32 %v985, 127.0
    %v1018 = vmin.f32 %v986, 127.0
    %v1019 = vmin.f32 %v987, 127.0
    %v1020 = vmin.f32 %v988, 127.0
    %v1021 = vmin.f32 %v989, 127.0
    %v1022 = vmin.f32 %v990, 127.0
    %v1023 = vmin.f32 %v991, 127.0
    %v1024 = vmin.f32 %v992, 127.0
    %v1025 = vmin.f32 %v993, 127.0
    %v1026 = vcvt.f32.s32.to.zero.pseudo %v994
    %v1027 = vcvt.f32.s32.to.zero.pseudo %v995
    %v1028 = vcvt.f32.s32.to.zero.pseudo %v996
    %v1029 = vcvt.f32.s32.to.zero.pseudo %v997
    %v1030 = vcvt.f32.s32.to.zero.pseudo %v998
    %v1031 = vcvt.f32.s32.to.zero.pseudo %v999
    %v1032 = vcvt.f32.s32.to.zero.pseudo %v1000
    %v1033 = vcvt.f32.s32.to.zero.pseudo %v1001
    %v1034 = vcvt.f32.s32.to.zero.pseudo %v1002
    %v1035 = vcvt.f32.s32.to.zero.pseudo %v1003
    %v1036 = vcvt.f32.s32.to.zero.pseudo %v1004
    %v1037 = vcvt.f32.s32.to.zero.pseudo %v1005
    %v1038 = vcvt.f32.s32.to.zero.pseudo %v1006
    %v1039 = vcvt.f32.s32.to.zero.pseudo %v1007
    %v1040 = vcvt.f32.s32.to.zero.pseudo %v1008
    %v1041 = vcvt.f32.s32.to.zero.pseudo %v1009
    %v1042 = vcvt.f32.s32.to.zero.pseudo %v1010
    %v1043 = vcvt.f32.s32.to.zero.pseudo %v1011
    %v1044 = vcvt.f32.s32.to.zero.pseudo %v1012
    %v1045 = vcvt.f32.s32.to.zero.pseudo %v1013
    %v1046 = vcvt.f32.s32.to.zero.pseudo %v1014
    %v1047 = vcvt.f32.s32.to.zero.pseudo %v1015
    %v1048 = vcvt.f32.s32.to.zero.pseudo %v1016
    %v1049 = vcvt.f32.s32.to.zero.pseudo %v1017
    %v1050 = vcvt.f32.s32.to.zero.pseudo %v1018
    %v1051 = vcvt.f32.s32.to.zero.pseudo %v1019
    %v1052 = vcvt.f32.s32.to.zero.pseudo %v1020
    %v1053 = vcvt.f32.s32.to.zero.pseudo %v1021
    %v1054 = vcvt.f32.s32.to.zero.pseudo %v1022
    %v1055 = vcvt.f32.s32.to.zero.pseudo %v1023
    %v1056 = vcvt.f32.s32.to.zero.pseudo %v1024
    %v1057 = vcvt.f32.s32.to.zero.pseudo %v1025
    %v1058 = vpack.c.b16 %v1026, %v1026
    %v1059 = vpack.c.b8 %v1058, %v1058
    %v1060 = vpack.c.b16 %v1027, %v1027
    %v1061 = vpack.c.b8 %v1060, %v1060
    %v1062 = vpack.c.b16 %v1028, %v1028
    %v1063 = vpack.c.b8 %v1062, %v1062
    %v1064 = vpack.c.b16 %v1029, %v1029
    %v1065 = vpack.c.b8 %v1064, %v1064
    %v1066 = vpack.c.b16 %v1030, %v1030
    %v1067 = vpack.c.b8 %v1066, %v1066
    %v1068 = vpack.c.b16 %v1031, %v1031
    %v1069 = vpack.c.b8 %v1068, %v1068
    %v1070 = vpack.c.b16 %v1032, %v1032
    %v1071 = vpack.c.b8 %v1070, %v1070
    %v1072 = vpack.c.b16 %v1033, %v1033
    %v1073 = vpack.c.b8 %v1072, %v1072
    %v1074 = vpack.c.b16 %v1034, %v1034
    %v1075 = vpack.c.b8 %v1074, %v1074
    %v1076 = vpack.c.b16 %v1035, %v1035
    %v1077 = vpack.c.b8 %v1076, %v1076
    %v1078 = vpack.c.b16 %v1036, %v1036
    %v1079 = vpack.c.b8 %v1078, %v1078
    %v1080 = vpack.c.b16 %v1037, %v1037
    %v1081 = vpack.c.b8 %v1080, %v1080
    %v1082 = vpack.c.b16 %v1038, %v1038
    %v1083 = vpack.c.b8 %v1082, %v1082
    %v1084 = vpack.c.b16 %v1039, %v1039
    %v1085 = vpack.c.b8 %v1084, %v1084
    %v1086 = vpack.c.b16 %v1040, %v1040
    %v1087 = vpack.c.b8 %v1086, %v1086
    %v1088 = vpack.c.b16 %v1041, %v1041
    %v1089 = vpack.c.b8 %v1088, %v1088
    %v1090 = vpack.c.b16 %v1042, %v1042
    %v1091 = vpack.c.b8 %v1090, %v1090
    %v1092 = vpack.c.b16 %v1043, %v1043
    %v1093 = vpack.c.b8 %v1092, %v1092
    %v1094 = vpack.c.b16 %v1044, %v1044
    %v1095 = vpack.c.b8 %v1094, %v1094
    %v1096 = vpack.c.b16 %v1045, %v1045
    %v1097 = vpack.c.b8 %v1096, %v1096
    %v1098 = vpack.c.b16 %v1046, %v1046
    %v1099 = vpack.c.b8 %v1098, %v1098
    %v1100 = vpack.c.b16 %v1047, %v1047
    %v1101 = vpack.c.b8 %v1100, %v1100
    %v1102 = vpack.c.b16 %v1048, %v1048
    %v1103 = vpack.c.b8 %v1102, %v1102
    %v1104 = vpack.c.b16 %v1049, %v1049
    %v1105 = vpack.c.b8 %v1104, %v1104
    %v1106 = vpack.c.b16 %v1050, %v1050
    %v1107 = vpack.c.b8 %v1106, %v1106
    %v1108 = vpack.c.b16 %v1051, %v1051
    %v1109 = vpack.c.b8 %v1108, %v1108
    %v1110 = vpack.c.b16 %v1052, %v1052
    %v1111 = vpack.c.b8 %v1110, %v1110
    %v1112 = vpack.c.b16 %v1053, %v1053
    %v1113 = vpack.c.b8 %v1112, %v1112
    %v1114 = vpack.c.b16 %v1054, %v1054
    %v1115 = vpack.c.b8 %v1114, %v1114
    %v1116 = vpack.c.b16 %v1055, %v1055
    %v1117 = vpack.c.b8 %v1116, %v1116
    %v1118 = vpack.c.b16 %v1056, %v1056
    %v1119 = vpack.c.b8 %v1118, %v1118
    %v1120 = vpack.c.b16 %v1057, %v1057
    %v1121 = vpack.c.b8 %v1120, %v1120
    %1122 = vst [vmem:[#allocation6] sm:$0x3] %v1059
    %1123 = vst [vmem:[#allocation6 + $0x2] sm:$0x3] %v1061
    %1124 = vst [vmem:[#allocation6 + $0x4] sm:$0x3] %v1063
    %1125 = vst [vmem:[#allocation6 + $0x6] sm:$0x3] %v1065
    %1126 = vst [vmem:[#allocation6 + $0x8] sm:$0x3] %v1067
    %1127 = vst [vmem:[#allocation6 + $0xa] sm:$0x3] %v1069
    %1128 = vst [vmem:[#allocation6 + $0xc] sm:$0x3] %v1071
    %1129 = vst [vmem:[#allocation6 + $0xe] sm:$0x3] %v1073
    %1130 = vst [vmem:[#allocation6 + $0x10] sm:$0x3] %v1075
    %1131 = vst [vmem:[#allocation6 + $0x12] sm:$0x3] %v1077
    %1132 = vst [vmem:[#allocation6 + $0x14] sm:$0x3] %v1079
    %1133 = vst [vmem:[#allocation6 + $0x16] sm:$0x3] %v1081
    %1134 = vst [vmem:[#allocation6 + $0x18] sm:$0x3] %v1083
    %1135 = vst [vmem:[#allocation6 + $0x1a] sm:$0x3] %v1085
    %1136 = vst [vmem:[#allocation6 + $0x1c] sm:$0x3] %v1087
    %1137 = vst [vmem:[#allocation6 + $0x1e] sm:$0x3] %v1089
    %1138 = vst [vmem:[#allocation6 + $0x20] sm:$0x3] %v1091
    %1139 = vst [vmem:[#allocation6 + $0x22] sm:$0x3] %v1093
    %1140 = vst [vmem:[#allocation6 + $0x24] sm:$0x3] %v1095
    %1141 = vst [vmem:[#allocation6 + $0x26] sm:$0x3] %v1097
    %1142 = vst [vmem:[#allocation6 + $0x28] sm:$0x3] %v1099
    %1143 = vst [vmem:[#allocation6 + $0x2a] sm:$0x3] %v1101
    %1144 = vst [vmem:[#allocation6 + $0x2c] sm:$0x3] %v1103
    %1145 = vst [vmem:[#allocation6 + $0x2e] sm:$0x3] %v1105
    %1146 = vst [vmem:[#allocation6 + $0x30] sm:$0x3] %v1107
    %1147 = vst [vmem:[#allocation6 + $0x32] sm:$0x3] %v1109
    %1148 = vst [vmem:[#allocation6 + $0x34] sm:$0x3] %v1111
    %1149 = vst [vmem:[#allocation6 + $0x36] sm:$0x3] %v1113
    %1150 = vst [vmem:[#allocation6 + $0x38] sm:$0x3] %v1115
    %1151 = vst [vmem:[#allocation6 + $0x3a] sm:$0x3] %v1117
    %1152 = vst [vmem:[#allocation6 + $0x3c] sm:$0x3] %v1119
    %1153 = vst [vmem:[#allocation6 + $0x3e] sm:$0x3] %v1121
    // Predicated region
    $region14: #{tpu_custom_call.1} parent=1 // pred_check
      _
    $region15: #{tpu_custom_call.1} parent=1 // pred_check_branch
      %1155 = sbr.rel (0) target = $region17
    $region16: #{tpu_custom_call.1} parent=1 // pred_region
      %s1157 = ssub.s32 1024, 1024
      %1158 = vsyncadd [#allocation5], %s1157
      %s1159 = sshll.u32 [#allocation6], 4
      %s1160 = int_to_ptr.vmem [resolvable:$true] %s1159
      %1165 = dma.vmem_to_hbm [thread:$0]  %s1160, 1024, %s1, [#allocation5], 32, 32, 2
    $region17: #{tpu_custom_call.1} parent=1 // pred_fallthru
      _
    // Predicated region
    $region18: #{tpu_custom_call.1} parent=1 // pred_check
      _
    $region19: #{tpu_custom_call.1} parent=1 // pred_check_branch
      %1167 = sbr.rel (0) target = $region21
    $region20: #{tpu_custom_call.1} parent=1 // pred_region
      %1168 = dma.done [#allocation5], 1024
    $region21: #{tpu_custom_call.1} parent=1 // pred_fallthru
      _
    %1169 = vsyncpa [#allocation4], 1
    %1170 = vsyncpa [#allocation5], 1

</llo_original>
